<compile_context>
chip_gen: v6e
topology: v6e:2x2x1
jax: 0.10.0
libtpu: 0.0.40
codegen_flags: <defaults>
</compile_context>

<pallas_src>
import functools
import math

import jax
import jax.numpy as jnp
from jax import lax
from jax.experimental import pallas as pl
from jax.experimental.pallas import tpu as pltpu


def _mhed_attn_kernel(x_ref, hid_ref, wq_ref, wkv_ref, w0_ref, out_ref,
                      q_scratch, m_scratch, l_scratch, acc_scratch,
                      *, heads, head_dim, scale):
    """Flash-style fused multi-head encoder-decoder attention.

    Grid = (query tiles ["parallel"], kv tiles ["arbitrary", innermost]).
    bf16 MXU inputs, f32 accumulation, exact f32 softmax.
    """
    HH = heads * head_dim
    j = pl.program_id(1)

    @pl.when(j == 0)
    def _init():
        m_scratch[...] = jnp.full(m_scratch.shape, -jnp.inf, m_scratch.dtype)
        l_scratch[...] = jnp.zeros(l_scratch.shape, l_scratch.dtype)
        acc_scratch[...] = jnp.zeros(acc_scratch.shape, acc_scratch.dtype)
        # All-head query projection: one [TQ, D] @ [D, heads*H] bf16 MXU matmul,
        # computed once per query tile and kept resident across the kv axis.
        q_all = jnp.dot(x_ref[...], wq_ref[...],
                        preferred_element_type=jnp.float32)
        q_scratch[...] = q_all.astype(q_scratch.dtype)

    # Fused key|value projection: one [TK, D] @ [D, 2*heads*H] bf16 MXU matmul.
    kv_all = jnp.dot(hid_ref[...], wkv_ref[...],
                     preferred_element_type=jnp.float32)
    # Transpose the key half once for all heads (instead of a per-head
    # rhs-contracted dot_general) and quantise the projected activations to
    # bf16 so the per-head score matmuls run as bf16 MXU ops.
    kt_all = kv_all[:, :HH].T.astype(jnp.bfloat16)           # [HH, TK]
    v_all = kv_all[:, HH:].astype(jnp.bfloat16)              # [TK, HH]
    q_all = q_scratch[...]                                    # [TQ, HH] bf16

    # Static unroll over heads (heads=4 here).
    # TODO(synk): for many heads, switch to lax.fori_loop + pl.ds(h*H, H) (or a
    # heads grid axis) so per-head score/prob temporaries don't all stay live.
    for h in range(heads):
        lo = h * head_dim
        hi = lo + head_dim
        s = jnp.dot(q_all[:, lo:hi], kt_all[lo:hi, :],
                    preferred_element_type=jnp.float32) * scale   # [TQ, TK]
        m_prev = m_scratch[h]                                      # [TQ, 1]
        l_prev = l_scratch[h]
        m_new = jnp.maximum(m_prev, jnp.max(s, axis=-1, keepdims=True))
        alpha = jnp.exp(m_prev - m_new)
        p = jnp.exp(s - m_new)
        l_scratch[h] = alpha * l_prev + jnp.sum(p, axis=-1, keepdims=True)
        # TODO(synk): for long sequences cast p to bf16 here for full-rate MXU
        # p@v; kept in f32 to stay numerically aligned with the f32 softmax.
        v_h = v_all[:, lo:hi].astype(jnp.float32)
        acc_scratch[h] = alpha * acc_scratch[h] + jnp.dot(
            p, v_h, preferred_element_type=jnp.float32)
        m_scratch[h] = m_new

    @pl.when(j == pl.num_programs(1) - 1)
    def _finalize():
        # Per-head output projection accumulated straight into the out tile:
        #   sum_h (acc_h / l_h) @ w0[h*H:(h+1)*H, :]  ==  concat(heads) @ w0
        # which removes the jnp.concatenate / [TQ, heads*H] relayout.
        w0 = w0_ref[...]
        out = jnp.zeros(out_ref.shape, jnp.float32)
        for h in range(heads):
            lo = h * head_dim
            hi = lo + head_dim
            o_h = (acc_scratch[h] / l_scratch[h]).astype(jnp.bfloat16)  # exact divide
            out = out + jnp.dot(o_h, w0[lo:hi, :],
                                preferred_element_type=jnp.float32)
        # NOTE: D < 128 here means a masked partial store; at real model sizes
        # (D >= 128) this final store is lane-dense.
        out_ref[...] = out.astype(out_ref.dtype)


def make_mhed_attention_params(wq, wk, wv, w0, compute_dtype=jnp.bfloat16):
    """Build the fused, lane-dense bf16 weight slabs ONCE (hoisted out of the
    per-call path; cache these next to the model parameters)."""
    heads, D, H = wq.shape
    # slab[:, h*H:(h+1)*H] == w[h], matching torch.cat(heads, dim=1) ordering.
    wq_slab = jnp.transpose(wq, (1, 0, 2)).reshape(D, heads * H)
    wk_slab = jnp.transpose(wk, (1, 0, 2)).reshape(D, heads * H)
    wv_slab = jnp.transpose(wv, (1, 0, 2)).reshape(D, heads * H)
    wkv_slab = jnp.concatenate([wk_slab, wv_slab], axis=1)   # [D, 2*heads*H]
    return dict(
        wq=wq_slab.astype(compute_dtype),
        wkv=wkv_slab.astype(compute_dtype),
        w0=w0.astype(compute_dtype),
        heads=heads,
        head_dim=H,
    )


def _choose_tile(dim, candidates):
    for c in candidates:
        if dim % c == 0:
            return c
    return dim


def multi_headed_enc_dec_attention(x, hidden, params, *, tile_q=None,
                                   tile_k=None, out_dtype=jnp.float32):
    """x: [Sx, D], hidden: [Sh, D]; params from make_mhed_attention_params."""
    heads, H = params["heads"], params["head_dim"]
    wq_slab, wkv_slab, w0 = params["wq"], params["wkv"], params["w0"]
    HH = heads * H
    Sx, D = x.shape
    Sh, _ = hidden.shape
    compute_dtype = wq_slab.dtype
    x = x.astype(compute_dtype)
    hidden = hidden.astype(compute_dtype)
    scale = 1.0 / math.sqrt(float(H))

    # Query tiles of >=256 rows keep the 256x256 MXU (v6e/v7x) full; the kv
    # tile bounds the [TQ, TK] score matrices so VMEM stays inside the v7x
    # 64 MiB budget for long encoder sequences.  Both are per-generation knobs
    # (v5e: cap tile_q ~128 and raise vmem_limit_bytes above its 16 MiB default).
    tq = tile_q if tile_q is not None else _choose_tile(Sx, (256, 128, 64, 32, 16, 8))
    tk = tile_k if tile_k is not None else _choose_tile(Sh, (512, 256, 128, 64, 32, 16, 8))
    assert Sx % tq == 0 and Sh % tk == 0, "sequence lengths must divide the tiles"
    nq, nk = Sx // tq, Sh // tk

    kernel = functools.partial(_mhed_attn_kernel, heads=heads, head_dim=H,
                               scale=scale)

    itemsize = x.dtype.itemsize
    cost = pl.CostEstimate(
        flops=int(2 * Sx * D * HH                 # q projection
                  + 2 * nq * Sh * D * 2 * HH      # k|v projection (per q tile)
                  + 2 * 2 * Sx * Sh * HH          # scores + p@v
                  + 2 * Sx * HH * D),             # output projection
        transcendentals=int(Sx * Sh * heads),
        bytes_accessed=int((Sx * D + nq * Sh * D + wq_slab.size
                            + wkv_slab.size + w0.size) * itemsize + Sx * D * 4),
    )

    return pl.pallas_call(
        kernel,
        out_shape=jax.ShapeDtypeStruct((Sx, D), out_dtype),
        grid_spec=pltpu.PrefetchScalarGridSpec(
            num_scalar_prefetch=0,
            grid=(nq, nk),
            in_specs=[
                pl.BlockSpec((tq, D), lambda i, j: (i, 0)),        # x tile
                pl.BlockSpec((tk, D), lambda i, j: (j, 0)),        # hidden tile
                pl.BlockSpec((D, HH), lambda i, j: (0, 0)),        # wq slab
                pl.BlockSpec((D, 2 * HH), lambda i, j: (0, 0)),    # wk|wv slab
                pl.BlockSpec((HH, D), lambda i, j: (0, 0)),        # w0
            ],
            out_specs=pl.BlockSpec((tq, D), lambda i, j: (i, 0)),
            scratch_shapes=[
                pltpu.VMEM((tq, HH), jnp.bfloat16),          # q projections
                pltpu.VMEM((heads, tq, 1), jnp.float32),     # running max
                pltpu.VMEM((heads, tq, 1), jnp.float32),     # running denom
                pltpu.VMEM((heads, tq, H), jnp.float32),     # unnormalised out
            ],
        ),
        compiler_params=pltpu.CompilerParams(
            # Query-tile axis shards across the two v7x TensorCores; the kv axis
            # carries the flash accumulator state so it stays "arbitrary".
            dimension_semantics=("parallel", "arbitrary"),
            # 32 MiB is safe on every generation (v5e scoped default is 16 MiB);
            # re-derive per generation when the tiles grow (v7x: 64 MiB total).
            vmem_limit_bytes=32 * 1024 * 1024,
        ),
        cost_estimate=cost,
    )(x, hidden, wq_slab, wkv_slab, w0)


def _reference(x, hidden, wq, wk, wv, w0, head_dim):
    """Pure-JAX mirror of the PyTorch forward, evaluated at the same precision
    the kernel uses (bf16 inputs/params/activations, f32 accumulate, f32 softmax)."""
    heads = wq.shape[0]
    hp = lax.Precision.HIGHEST

    def bf16_round(a):
        return a.astype(jnp.bfloat16).astype(jnp.float32)

    outs = []
    for h in range(heads):
        q = bf16_round(jnp.dot(x, wq[h], precision=hp))
        k = bf16_round(jnp.dot(hidden, wk[h], precision=hp))
        v = bf16_round(jnp.dot(hidden, wv[h], precision=hp))
        a = jnp.dot(q, k.T, precision=hp) / jnp.sqrt(jnp.float32(head_dim))
        p = jax.nn.softmax(a, axis=-1)
        outs.append(bf16_round(jnp.dot(p, v, precision=hp)))
    concatenated = jnp.concatenate(outs, axis=1)
    return jnp.dot(concatenated, w0, precision=hp)


if __name__ == "__main__":
    # Small, module-consistent shapes: input_size=32, hidden_size=16, heads=4.
    input_size, hidden_size, heads = 32, 16, 4
    Sx, Sh = 16, 24   # decoder / encoder sequence lengths

    key = jax.random.PRNGKey(0)
    kx, kh, kq, kk, kv, k0 = jax.random.split(key, 6)

    # Deterministic kaiming-normal-style init (gain=sqrt(2)).
    def kaiming(k, shape):
        std = math.sqrt(2.0 / shape[-1])
        return std * jax.random.normal(k, shape, dtype=jnp.float32)

    x = jax.random.normal(kx, (Sx, input_size), dtype=jnp.float32)
    hidden = jax.random.normal(kh, (Sh, input_size), dtype=jnp.float32)
    wq = kaiming(kq, (heads, input_size, hidden_size))
    wk = kaiming(kk, (heads, input_size, hidden_size))
    wv = kaiming(kv, (heads, input_size, hidden_size))
    w0 = kaiming(k0, (heads * hidden_size, input_size))

    # One-time parameter prep (slab construction hoisted out of the call path)
    # and one-time bf16 quantisation of the activations.
    params = make_mhed_attention_params(wq, wk, wv, w0)
    x_q = x.astype(jnp.bfloat16)
    hidden_q = hidden.astype(jnp.bfloat16)

    # Small tiles so the (parallel q-tile, arbitrary kv-tile) grid and the
    # flash accumulation across kv steps are actually exercised: grid = (2, 3).
    out = multi_headed_enc_dec_attention(x_q, hidden_q, params,
                                         tile_q=8, tile_k=8)
    out = jax.block_until_ready(out)

    f32 = jnp.float32
    ref = _reference(x_q.astype(f32), hidden_q.astype(f32),
                     wq.astype(jnp.bfloat16).astype(f32),
                     wk.astype(jnp.bfloat16).astype(f32),
                     wv.astype(jnp.bfloat16).astype(f32),
                     w0.astype(jnp.bfloat16).astype(f32),
                     hidden_size)

    assert out.shape == (Sx, input_size) and out.dtype == jnp.float32
    # Kernel and reference share the same bf16-input / f32-accumulate precision,
    # so agreement is ~1e-5; 1e-2 leaves margin for MXU accumulation-order and
    # rare bf16 rounding-boundary differences on hardware.
    assert jnp.allclose(out, ref, atol=1e-2, rtol=1e-2), "mismatch vs reference"
    print("KERNEL_OK")
</pallas_src>

<mosaic_0001>
module attributes {stable_mosaic.version = 11 : i64} {
  func.func @_mhed_attn_kernel(%arg0: i32, %arg1: i32, %arg2: memref<8x32xbf16, #tpu.memory_space<vmem>>, %arg3: memref<8x32xbf16, #tpu.memory_space<vmem>>, %arg4: memref<32x64xbf16, #tpu.memory_space<vmem>>, %arg5: memref<32x128xbf16, #tpu.memory_space<vmem>>, %arg6: memref<64x32xbf16, #tpu.memory_space<vmem>>, %arg7: memref<8x32xf32, #tpu.memory_space<vmem>>, %arg8: memref<8x64xbf16, #tpu.memory_space<vmem>>, %arg9: memref<4x8x1xf32, #tpu.memory_space<vmem>>, %arg10: memref<4x8x1xf32, #tpu.memory_space<vmem>>, %arg11: memref<4x8x16xf32, #tpu.memory_space<vmem>>) attributes {dimension_semantics = [#tpu.dimension_semantics<parallel>, #tpu.dimension_semantics<arbitrary>], iteration_bounds = array<i64: 2, 3>, scalar_prefetch = 0 : i64, scratch_operands = 4 : i64, tpu.core_type = #tpu.core_type<tc>, window_params = [{transform_indices = @transform_0, window_bounds = array<i64: 8, 32>}, {transform_indices = @transform_1, window_bounds = array<i64: 8, 32>}, {pipeline_mode = #tpu.pipeline_mode<synchronous>, transform_indices = @transform_2, window_bounds = array<i64: 32, 64>}, {pipeline_mode = #tpu.pipeline_mode<synchronous>, transform_indices = @transform_3, window_bounds = array<i64: 32, 128>}, {pipeline_mode = #tpu.pipeline_mode<synchronous>, transform_indices = @transform_4, window_bounds = array<i64: 64, 32>}, {transform_indices = @transform_5, window_bounds = array<i64: 8, 32>}]} {
    %c0_i32 = arith.constant 0 : i32
    %0 = arith.cmpi eq, %arg1, %c0_i32 : i32
    %1 = arith.extui %0 : i1 to i32
    %c0_i32_0 = arith.constant 0 : i32
    %2 = arith.cmpi ne, %1, %c0_i32_0 : i32
    scf.if %2 {
      %cst_96 = arith.constant 0xFF800000 : f32
      %167 = vector.broadcast %cst_96 : f32 to vector<4x8x1xf32>
      %c0_97 = arith.constant 0 : index
      %c0_98 = arith.constant 0 : index
      %c0_99 = arith.constant 0 : index
      %168 = vector.load %arg9[%c0_97, %c0_98, %c0_99] : memref<4x8x1xf32, #tpu.memory_space<vmem>>, vector<4x8x1xf32>
      tpu.vector_store %arg9[%c0_97, %c0_98, %c0_99], %167 {strides = array<i32>} : memref<4x8x1xf32, #tpu.memory_space<vmem>>, vector<4x8x1xf32>,
      %cst_100 = arith.constant 0.000000e+00 : f32
      %169 = vector.broadcast %cst_100 : f32 to vector<4x8x1xf32>
      %c0_101 = arith.constant 0 : index
      %c0_102 = arith.constant 0 : index
      %c0_103 = arith.constant 0 : index
      %170 = vector.load %arg10[%c0_101, %c0_102, %c0_103] : memref<4x8x1xf32, #tpu.memory_space<vmem>>, vector<4x8x1xf32>
      tpu.vector_store %arg10[%c0_101, %c0_102, %c0_103], %169 {strides = array<i32>} : memref<4x8x1xf32, #tpu.memory_space<vmem>>, vector<4x8x1xf32>,
      %cst_104 = arith.constant 0.000000e+00 : f32
      %171 = vector.broadcast %cst_104 : f32 to vector<4x8x16xf32>
      %c0_105 = arith.constant 0 : index
      %c0_106 = arith.constant 0 : index
      %c0_107 = arith.constant 0 : index
      %172 = vector.load %arg11[%c0_105, %c0_106, %c0_107] : memref<4x8x16xf32, #tpu.memory_space<vmem>>, vector<4x8x16xf32>
      tpu.vector_store %arg11[%c0_105, %c0_106, %c0_107], %171 {strides = array<i32>} : memref<4x8x16xf32, #tpu.memory_space<vmem>>, vector<4x8x16xf32>,
      %c0_108 = arith.constant 0 : index
      %c0_109 = arith.constant 0 : index
      %173 = vector.load %arg2[%c0_108, %c0_109] : memref<8x32xbf16, #tpu.memory_space<vmem>>, vector<8x32xbf16>
      %c0_110 = arith.constant 0 : index
      %c0_111 = arith.constant 0 : index
      %174 = vector.load %arg4[%c0_110, %c0_111] : memref<32x64xbf16, #tpu.memory_space<vmem>>, vector<32x64xbf16>
      %cst_112 = arith.constant dense<0.000000e+00> : vector<8x64xf32>
      %175 = tpu.matmul %173, %174, %cst_112 {dimension_numbers = #tpu.dot_dimension_numbers<[1], [0], [0], [1], [0, 0, 1, 1], [], []>} : vector<8x32xbf16>, vector<32x64xbf16>, vector<8x64xf32> -> vector<8x64xf32>
      %176 = arith.truncf %175 : vector<8x64xf32> to vector<8x64xbf16>
      %c0_113 = arith.constant 0 : index
      %c0_114 = arith.constant 0 : index
      %177 = vector.load %arg8[%c0_113, %c0_114] : memref<8x64xbf16, #tpu.memory_space<vmem>>, vector<8x64xbf16>
      tpu.vector_store %arg8[%c0_113, %c0_114], %176 {strides = array<i32>} : memref<8x64xbf16, #tpu.memory_space<vmem>>, vector<8x64xbf16>,
    } else {
    }
    %c0 = arith.constant 0 : index
    %c0_1 = arith.constant 0 : index
    %3 = vector.load %arg3[%c0, %c0_1] : memref<8x32xbf16, #tpu.memory_space<vmem>>, vector<8x32xbf16>
    %c0_2 = arith.constant 0 : index
    %c0_3 = arith.constant 0 : index
    %4 = vector.load %arg5[%c0_2, %c0_3] : memref<32x128xbf16, #tpu.memory_space<vmem>>, vector<32x128xbf16>
    %cst = arith.constant dense<0.000000e+00> : vector<8x128xf32>
    %5 = tpu.matmul %3, %4, %cst {dimension_numbers = #tpu.dot_dimension_numbers<[1], [0], [0], [1], [0, 0, 1, 1], [], []>} : vector<8x32xbf16>, vector<32x128xbf16>, vector<8x128xf32> -> vector<8x128xf32>
    %6 = vector.extract_strided_slice %5 {offsets = [0, 0], sizes = [8, 64], strides = [1, 1]} : vector<8x128xf32> to vector<8x64xf32>
    %7 = tpu.transpose %6, [1, 0] : vector<8x64xf32> -> vector<64x8xf32>
    %8 = arith.truncf %7 : vector<64x8xf32> to vector<64x8xbf16>
    %9 = vector.extract_strided_slice %5 {offsets = [0, 64], sizes = [8, 64], strides = [1, 1]} : vector<8x128xf32> to vector<8x64xf32>
    %10 = arith.truncf %9 : vector<8x64xf32> to vector<8x64xbf16>
    %c0_4 = arith.constant 0 : index
    %c0_5 = arith.constant 0 : index
    %11 = vector.load %arg8[%c0_4, %c0_5] : memref<8x64xbf16, #tpu.memory_space<vmem>>, vector<8x64xbf16>
    %12 = vector.extract_strided_slice %11 {offsets = [0, 0], sizes = [8, 16], strides = [1, 1]} : vector<8x64xbf16> to vector<8x16xbf16>
    %13 = vector.extract_strided_slice %8 {offsets = [0, 0], sizes = [16, 8], strides = [1, 1]} : vector<64x8xbf16> to vector<16x8xbf16>
    %cst_6 = arith.constant dense<0.000000e+00> : vector<8x8xf32>
    %14 = tpu.matmul %12, %13, %cst_6 {dimension_numbers = #tpu.dot_dimension_numbers<[1], [0], [0], [1], [0, 0, 1, 1], [], []>} : vector<8x16xbf16>, vector<16x8xbf16>, vector<8x8xf32> -> vector<8x8xf32>
    %cst_7 = arith.constant 2.500000e-01 : f32
    %15 = vector.broadcast %cst_7 : f32 to vector<8x8xf32>
    %16 = arith.mulf %14, %15 : vector<8x8xf32>
    %c0_8 = arith.constant 0 : index
    %c0_9 = arith.constant 0 : index
    %c0_10 = arith.constant 0 : index
    %17 = vector.load %arg9[%c0_8, %c0_9, %c0_10] : memref<4x8x1xf32, #tpu.memory_space<vmem>>, vector<1x8x1xf32>
    %18 = vector.shape_cast %17 : vector<1x8x1xf32> to vector<8x1xf32>
    %c0_11 = arith.constant 0 : index
    %c0_12 = arith.constant 0 : index
    %c0_13 = arith.constant 0 : index
    %19 = vector.load %arg10[%c0_11, %c0_12, %c0_13] : memref<4x8x1xf32, #tpu.memory_space<vmem>>, vector<1x8x1xf32>
    %20 = vector.shape_cast %19 : vector<1x8x1xf32> to vector<8x1xf32>
    %cst_14 = arith.constant dense<0xFF800000> : vector<8xf32>
    %21 = vector.multi_reduction <maximumf>, %16, %cst_14 [1] : vector<8x8xf32> to vector<8xf32>
    %22 = vector.shape_cast %21 : vector<8xf32> to vector<8x1xf32>
    %23 = arith.maximumf %18, %22 : vector<8x1xf32>
    %24 = arith.subf %18, %23 : vector<8x1xf32>
    %25 = math.exp %24 : vector<8x1xf32>
    %26 = vector.broadcast %23 : vector<8x1xf32> to vector<8x8xf32>
    %27 = arith.subf %16, %26 : vector<8x8xf32>
    %28 = math.exp %27 : vector<8x8xf32>
    %29 = arith.mulf %25, %20 : vector<8x1xf32>
    %cst_15 = arith.constant dense<0.000000e+00> : vector<8xf32>
    %30 = vector.multi_reduction <add>, %28, %cst_15 [1] : vector<8x8xf32> to vector<8xf32>
    %31 = vector.shape_cast %30 : vector<8xf32> to vector<8x1xf32>
    %32 = arith.addf %29, %31 : vector<8x1xf32>
    %c0_16 = arith.constant 0 : index
    %c0_17 = arith.constant 0 : index
    %c0_18 = arith.constant 0 : index
    %33 = vector.load %arg10[%c0_16, %c0_17, %c0_18] : memref<4x8x1xf32, #tpu.memory_space<vmem>>, vector<1x8x1xf32>
    %34 = vector.shape_cast %33 : vector<1x8x1xf32> to vector<8x1xf32>
    %35 = vector.shape_cast %32 : vector<8x1xf32> to vector<1x8x1xf32>
    tpu.vector_store %arg10[%c0_16, %c0_17, %c0_18], %35 {strides = array<i32>} : memref<4x8x1xf32, #tpu.memory_space<vmem>>, vector<1x8x1xf32>,
    %36 = vector.extract_strided_slice %10 {offsets = [0, 0], sizes = [8, 16], strides = [1, 1]} : vector<8x64xbf16> to vector<8x16xbf16>
    %37 = arith.extf %36 : vector<8x16xbf16> to vector<8x16xf32>
    %c0_19 = arith.constant 0 : index
    %c0_20 = arith.constant 0 : index
    %c0_21 = arith.constant 0 : index
    %38 = vector.load %arg11[%c0_19, %c0_20, %c0_21] : memref<4x8x16xf32, #tpu.memory_space<vmem>>, vector<1x8x16xf32>
    %39 = vector.shape_cast %38 : vector<1x8x16xf32> to vector<8x16xf32>
    %40 = vector.broadcast %25 : vector<8x1xf32> to vector<8x16xf32>
    %41 = arith.mulf %40, %39 : vector<8x16xf32>
    %cst_22 = arith.constant dense<0.000000e+00> : vector<8x16xf32>
    %42 = tpu.matmul %28, %37, %cst_22 {dimension_numbers = #tpu.dot_dimension_numbers<[1], [0], [0], [1], [0, 0, 1, 1], [], []>} : vector<8x8xf32>, vector<8x16xf32>, vector<8x16xf32> -> vector<8x16xf32>
    %43 = arith.addf %41, %42 : vector<8x16xf32>
    %c0_23 = arith.constant 0 : index
    %c0_24 = arith.constant 0 : index
    %c0_25 = arith.constant 0 : index
    %44 = vector.load %arg11[%c0_23, %c0_24, %c0_25] : memref<4x8x16xf32, #tpu.memory_space<vmem>>, vector<1x8x16xf32>
    %45 = vector.shape_cast %44 : vector<1x8x16xf32> to vector<8x16xf32>
    %46 = vector.shape_cast %43 : vector<8x16xf32> to vector<1x8x16xf32>
    tpu.vector_store %arg11[%c0_23, %c0_24, %c0_25], %46 {strides = array<i32>} : memref<4x8x16xf32, #tpu.memory_space<vmem>>, vector<1x8x16xf32>,
    %c0_26 = arith.constant 0 : index
    %c0_27 = arith.constant 0 : index
    %c0_28 = arith.constant 0 : index
    %47 = vector.load %arg9[%c0_26, %c0_27, %c0_28] : memref<4x8x1xf32, #tpu.memory_space<vmem>>, vector<1x8x1xf32>
    %48 = vector.shape_cast %47 : vector<1x8x1xf32> to vector<8x1xf32>
    %49 = vector.shape_cast %23 : vector<8x1xf32> to vector<1x8x1xf32>
    tpu.vector_store %arg9[%c0_26, %c0_27, %c0_28], %49 {strides = array<i32>} : memref<4x8x1xf32, #tpu.memory_space<vmem>>, vector<1x8x1xf32>,
    %50 = vector.extract_strided_slice %11 {offsets = [0, 16], sizes = [8, 16], strides = [1, 1]} : vector<8x64xbf16> to vector<8x16xbf16>
    %51 = vector.extract_strided_slice %8 {offsets = [16, 0], sizes = [16, 8], strides = [1, 1]} : vector<64x8xbf16> to vector<16x8xbf16>
    %cst_29 = arith.constant dense<0.000000e+00> : vector<8x8xf32>
    %52 = tpu.matmul %50, %51, %cst_29 {dimension_numbers = #tpu.dot_dimension_numbers<[1], [0], [0], [1], [0, 0, 1, 1], [], []>} : vector<8x16xbf16>, vector<16x8xbf16>, vector<8x8xf32> -> vector<8x8xf32>
    %cst_30 = arith.constant 2.500000e-01 : f32
    %53 = vector.broadcast %cst_30 : f32 to vector<8x8xf32>
    %54 = arith.mulf %52, %53 : vector<8x8xf32>
    %c1 = arith.constant 1 : index
    %c0_31 = arith.constant 0 : index
    %c0_32 = arith.constant 0 : index
    %55 = vector.load %arg9[%c1, %c0_31, %c0_32] : memref<4x8x1xf32, #tpu.memory_space<vmem>>, vector<1x8x1xf32>
    %56 = vector.shape_cast %55 : vector<1x8x1xf32> to vector<8x1xf32>
    %c1_33 = arith.constant 1 : index
    %c0_34 = arith.constant 0 : index
    %c0_35 = arith.constant 0 : index
    %57 = vector.load %arg10[%c1_33, %c0_34, %c0_35] : memref<4x8x1xf32, #tpu.memory_space<vmem>>, vector<1x8x1xf32>
    %58 = vector.shape_cast %57 : vector<1x8x1xf32> to vector<8x1xf32>
    %cst_36 = arith.constant dense<0xFF800000> : vector<8xf32>
    %59 = vector.multi_reduction <maximumf>, %54, %cst_36 [1] : vector<8x8xf32> to vector<8xf32>
    %60 = vector.shape_cast %59 : vector<8xf32> to vector<8x1xf32>
    %61 = arith.maximumf %56, %60 : vector<8x1xf32>
    %62 = arith.subf %56, %61 : vector<8x1xf32>
    %63 = math.exp %62 : vector<8x1xf32>
    %64 = vector.broadcast %61 : vector<8x1xf32> to vector<8x8xf32>
    %65 = arith.subf %54, %64 : vector<8x8xf32>
    %66 = math.exp %65 : vector<8x8xf32>
    %67 = arith.mulf %63, %58 : vector<8x1xf32>
    %cst_37 = arith.constant dense<0.000000e+00> : vector<8xf32>
    %68 = vector.multi_reduction <add>, %66, %cst_37 [1] : vector<8x8xf32> to vector<8xf32>
    %69 = vector.shape_cast %68 : vector<8xf32> to vector<8x1xf32>
    %70 = arith.addf %67, %69 : vector<8x1xf32>
    %c1_38 = arith.constant 1 : index
    %c0_39 = arith.constant 0 : index
    %c0_40 = arith.constant 0 : index
    %71 = vector.load %arg10[%c1_38, %c0_39, %c0_40] : memref<4x8x1xf32, #tpu.memory_space<vmem>>, vector<1x8x1xf32>
    %72 = vector.shape_cast %71 : vector<1x8x1xf32> to vector<8x1xf32>
    %73 = vector.shape_cast %70 : vector<8x1xf32> to vector<1x8x1xf32>
    tpu.vector_store %arg10[%c1_38, %c0_39, %c0_40], %73 {strides = array<i32>} : memref<4x8x1xf32, #tpu.memory_space<vmem>>, vector<1x8x1xf32>,
    %74 = vector.extract_strided_slice %10 {offsets = [0, 16], sizes = [8, 16], strides = [1, 1]} : vector<8x64xbf16> to vector<8x16xbf16>
    %75 = arith.extf %74 : vector<8x16xbf16> to vector<8x16xf32>
    %c1_41 = arith.constant 1 : index
    %c0_42 = arith.constant 0 : index
    %c0_43 = arith.constant 0 : index
    %76 = vector.load %arg11[%c1_41, %c0_42, %c0_43] : memref<4x8x16xf32, #tpu.memory_space<vmem>>, vector<1x8x16xf32>
    %77 = vector.shape_cast %76 : vector<1x8x16xf32> to vector<8x16xf32>
    %78 = vector.broadcast %63 : vector<8x1xf32> to vector<8x16xf32>
    %79 = arith.mulf %78, %77 : vector<8x16xf32>
    %cst_44 = arith.constant dense<0.000000e+00> : vector<8x16xf32>
    %80 = tpu.matmul %66, %75, %cst_44 {dimension_numbers = #tpu.dot_dimension_numbers<[1], [0], [0], [1], [0, 0, 1, 1], [], []>} : vector<8x8xf32>, vector<8x16xf32>, vector<8x16xf32> -> vector<8x16xf32>
    %81 = arith.addf %79, %80 : vector<8x16xf32>
    %c1_45 = arith.constant 1 : index
    %c0_46 = arith.constant 0 : index
    %c0_47 = arith.constant 0 : index
    %82 = vector.load %arg11[%c1_45, %c0_46, %c0_47] : memref<4x8x16xf32, #tpu.memory_space<vmem>>, vector<1x8x16xf32>
    %83 = vector.shape_cast %82 : vector<1x8x16xf32> to vector<8x16xf32>
    %84 = vector.shape_cast %81 : vector<8x16xf32> to vector<1x8x16xf32>
    tpu.vector_store %arg11[%c1_45, %c0_46, %c0_47], %84 {strides = array<i32>} : memref<4x8x16xf32, #tpu.memory_space<vmem>>, vector<1x8x16xf32>,
    %c1_48 = arith.constant 1 : index
    %c0_49 = arith.constant 0 : index
    %c0_50 = arith.constant 0 : index
    %85 = vector.load %arg9[%c1_48, %c0_49, %c0_50] : memref<4x8x1xf32, #tpu.memory_space<vmem>>, vector<1x8x1xf32>
    %86 = vector.shape_cast %85 : vector<1x8x1xf32> to vector<8x1xf32>
    %87 = vector.shape_cast %61 : vector<8x1xf32> to vector<1x8x1xf32>
    tpu.vector_store %arg9[%c1_48, %c0_49, %c0_50], %87 {strides = array<i32>} : memref<4x8x1xf32, #tpu.memory_space<vmem>>, vector<1x8x1xf32>,
    %88 = vector.extract_strided_slice %11 {offsets = [0, 32], sizes = [8, 16], strides = [1, 1]} : vector<8x64xbf16> to vector<8x16xbf16>
    %89 = vector.extract_strided_slice %8 {offsets = [32, 0], sizes = [16, 8], strides = [1, 1]} : vector<64x8xbf16> to vector<16x8xbf16>
    %cst_51 = arith.constant dense<0.000000e+00> : vector<8x8xf32>
    %90 = tpu.matmul %88, %89, %cst_51 {dimension_numbers = #tpu.dot_dimension_numbers<[1], [0], [0], [1], [0, 0, 1, 1], [], []>} : vector<8x16xbf16>, vector<16x8xbf16>, vector<8x8xf32> -> vector<8x8xf32>
    %cst_52 = arith.constant 2.500000e-01 : f32
    %91 = vector.broadcast %cst_52 : f32 to vector<8x8xf32>
    %92 = arith.mulf %90, %91 : vector<8x8xf32>
    %c2 = arith.constant 2 : index
    %c0_53 = arith.constant 0 : index
    %c0_54 = arith.constant 0 : index
    %93 = vector.load %arg9[%c2, %c0_53, %c0_54] : memref<4x8x1xf32, #tpu.memory_space<vmem>>, vector<1x8x1xf32>
    %94 = vector.shape_cast %93 : vector<1x8x1xf32> to vector<8x1xf32>
    %c2_55 = arith.constant 2 : index
    %c0_56 = arith.constant 0 : index
    %c0_57 = arith.constant 0 : index
    %95 = vector.load %arg10[%c2_55, %c0_56, %c0_57] : memref<4x8x1xf32, #tpu.memory_space<vmem>>, vector<1x8x1xf32>
    %96 = vector.shape_cast %95 : vector<1x8x1xf32> to vector<8x1xf32>
    %cst_58 = arith.constant dense<0xFF800000> : vector<8xf32>
    %97 = vector.multi_reduction <maximumf>, %92, %cst_58 [1] : vector<8x8xf32> to vector<8xf32>
    %98 = vector.shape_cast %97 : vector<8xf32> to vector<8x1xf32>
    %99 = arith.maximumf %94, %98 : vector<8x1xf32>
    %100 = arith.subf %94, %99 : vector<8x1xf32>
    %101 = math.exp %100 : vector<8x1xf32>
    %102 = vector.broadcast %99 : vector<8x1xf32> to vector<8x8xf32>
    %103 = arith.subf %92, %102 : vector<8x8xf32>
    %104 = math.exp %103 : vector<8x8xf32>
    %105 = arith.mulf %101, %96 : vector<8x1xf32>
    %cst_59 = arith.constant dense<0.000000e+00> : vector<8xf32>
    %106 = vector.multi_reduction <add>, %104, %cst_59 [1] : vector<8x8xf32> to vector<8xf32>
    %107 = vector.shape_cast %106 : vector<8xf32> to vector<8x1xf32>
    %108 = arith.addf %105, %107 : vector<8x1xf32>
    %c2_60 = arith.constant 2 : index
    %c0_61 = arith.constant 0 : index
    %c0_62 = arith.constant 0 : index
    %109 = vector.load %arg10[%c2_60, %c0_61, %c0_62] : memref<4x8x1xf32, #tpu.memory_space<vmem>>, vector<1x8x1xf32>
    %110 = vector.shape_cast %109 : vector<1x8x1xf32> to vector<8x1xf32>
    %111 = vector.shape_cast %108 : vector<8x1xf32> to vector<1x8x1xf32>
    tpu.vector_store %arg10[%c2_60, %c0_61, %c0_62], %111 {strides = array<i32>} : memref<4x8x1xf32, #tpu.memory_space<vmem>>, vector<1x8x1xf32>,
    %112 = vector.extract_strided_slice %10 {offsets = [0, 32], sizes = [8, 16], strides = [1, 1]} : vector<8x64xbf16> to vector<8x16xbf16>
    %113 = arith.extf %112 : vector<8x16xbf16> to vector<8x16xf32>
    %c2_63 = arith.constant 2 : index
    %c0_64 = arith.constant 0 : index
    %c0_65 = arith.constant 0 : index
    %114 = vector.load %arg11[%c2_63, %c0_64, %c0_65] : memref<4x8x16xf32, #tpu.memory_space<vmem>>, vector<1x8x16xf32>
    %115 = vector.shape_cast %114 : vector<1x8x16xf32> to vector<8x16xf32>
    %116 = vector.broadcast %101 : vector<8x1xf32> to vector<8x16xf32>
    %117 = arith.mulf %116, %115 : vector<8x16xf32>
    %cst_66 = arith.constant dense<0.000000e+00> : vector<8x16xf32>
    %118 = tpu.matmul %104, %113, %cst_66 {dimension_numbers = #tpu.dot_dimension_numbers<[1], [0], [0], [1], [0, 0, 1, 1], [], []>} : vector<8x8xf32>, vector<8x16xf32>, vector<8x16xf32> -> vector<8x16xf32>
    %119 = arith.addf %117, %118 : vector<8x16xf32>
    %c2_67 = arith.constant 2 : index
    %c0_68 = arith.constant 0 : index
    %c0_69 = arith.constant 0 : index
    %120 = vector.load %arg11[%c2_67, %c0_68, %c0_69] : memref<4x8x16xf32, #tpu.memory_space<vmem>>, vector<1x8x16xf32>
    %121 = vector.shape_cast %120 : vector<1x8x16xf32> to vector<8x16xf32>
    %122 = vector.shape_cast %119 : vector<8x16xf32> to vector<1x8x16xf32>
    tpu.vector_store %arg11[%c2_67, %c0_68, %c0_69], %122 {strides = array<i32>} : memref<4x8x16xf32, #tpu.memory_space<vmem>>, vector<1x8x16xf32>,
    %c2_70 = arith.constant 2 : index
    %c0_71 = arith.constant 0 : index
    %c0_72 = arith.constant 0 : index
    %123 = vector.load %arg9[%c2_70, %c0_71, %c0_72] : memref<4x8x1xf32, #tpu.memory_space<vmem>>, vector<1x8x1xf32>
    %124 = vector.shape_cast %123 : vector<1x8x1xf32> to vector<8x1xf32>
    %125 = vector.shape_cast %99 : vector<8x1xf32> to vector<1x8x1xf32>
    tpu.vector_store %arg9[%c2_70, %c0_71, %c0_72], %125 {strides = array<i32>} : memref<4x8x1xf32, #tpu.memory_space<vmem>>, vector<1x8x1xf32>,
    %126 = vector.extract_strided_slice %11 {offsets = [0, 48], sizes = [8, 16], strides = [1, 1]} : vector<8x64xbf16> to vector<8x16xbf16>
    %127 = vector.extract_strided_slice %8 {offsets = [48, 0], sizes = [16, 8], strides = [1, 1]} : vector<64x8xbf16> to vector<16x8xbf16>
    %cst_73 = arith.constant dense<0.000000e+00> : vector<8x8xf32>
    %128 = tpu.matmul %126, %127, %cst_73 {dimension_numbers = #tpu.dot_dimension_numbers<[1], [0], [0], [1], [0, 0, 1, 1], [], []>} : vector<8x16xbf16>, vector<16x8xbf16>, vector<8x8xf32> -> vector<8x8xf32>
    %cst_74 = arith.constant 2.500000e-01 : f32
    %129 = vector.broadcast %cst_74 : f32 to vector<8x8xf32>
    %130 = arith.mulf %128, %129 : vector<8x8xf32>
    %c3 = arith.constant 3 : index
    %c0_75 = arith.constant 0 : index
    %c0_76 = arith.constant 0 : index
    %131 = vector.load %arg9[%c3, %c0_75, %c0_76] : memref<4x8x1xf32, #tpu.memory_space<vmem>>, vector<1x8x1xf32>
    %132 = vector.shape_cast %131 : vector<1x8x1xf32> to vector<8x1xf32>
    %c3_77 = arith.constant 3 : index
    %c0_78 = arith.constant 0 : index
    %c0_79 = arith.constant 0 : index
    %133 = vector.load %arg10[%c3_77, %c0_78, %c0_79] : memref<4x8x1xf32, #tpu.memory_space<vmem>>, vector<1x8x1xf32>
    %134 = vector.shape_cast %133 : vector<1x8x1xf32> to vector<8x1xf32>
    %cst_80 = arith.constant dense<0xFF800000> : vector<8xf32>
    %135 = vector.multi_reduction <maximumf>, %130, %cst_80 [1] : vector<8x8xf32> to vector<8xf32>
    %136 = vector.shape_cast %135 : vector<8xf32> to vector<8x1xf32>
    %137 = arith.maximumf %132, %136 : vector<8x1xf32>
    %138 = arith.subf %132, %137 : vector<8x1xf32>
    %139 = math.exp %138 : vector<8x1xf32>
    %140 = vector.broadcast %137 : vector<8x1xf32> to vector<8x8xf32>
    %141 = arith.subf %130, %140 : vector<8x8xf32>
    %142 = math.exp %141 : vector<8x8xf32>
    %143 = arith.mulf %139, %134 : vector<8x1xf32>
    %cst_81 = arith.constant dense<0.000000e+00> : vector<8xf32>
    %144 = vector.multi_reduction <add>, %142, %cst_81 [1] : vector<8x8xf32> to vector<8xf32>
    %145 = vector.shape_cast %144 : vector<8xf32> to vector<8x1xf32>
    %146 = arith.addf %143, %145 : vector<8x1xf32>
    %c3_82 = arith.constant 3 : index
    %c0_83 = arith.constant 0 : index
    %c0_84 = arith.constant 0 : index
    %147 = vector.load %arg10[%c3_82, %c0_83, %c0_84] : memref<4x8x1xf32, #tpu.memory_space<vmem>>, vector<1x8x1xf32>
    %148 = vector.shape_cast %147 : vector<1x8x1xf32> to vector<8x1xf32>
    %149 = vector.shape_cast %146 : vector<8x1xf32> to vector<1x8x1xf32>
    tpu.vector_store %arg10[%c3_82, %c0_83, %c0_84], %149 {strides = array<i32>} : memref<4x8x1xf32, #tpu.memory_space<vmem>>, vector<1x8x1xf32>,
    %150 = vector.extract_strided_slice %10 {offsets = [0, 48], sizes = [8, 16], strides = [1, 1]} : vector<8x64xbf16> to vector<8x16xbf16>
    %151 = arith.extf %150 : vector<8x16xbf16> to vector<8x16xf32>
    %c3_85 = arith.constant 3 : index
    %c0_86 = arith.constant 0 : index
    %c0_87 = arith.constant 0 : index
    %152 = vector.load %arg11[%c3_85, %c0_86, %c0_87] : memref<4x8x16xf32, #tpu.memory_space<vmem>>, vector<1x8x16xf32>
    %153 = vector.shape_cast %152 : vector<1x8x16xf32> to vector<8x16xf32>
    %154 = vector.broadcast %139 : vector<8x1xf32> to vector<8x16xf32>
    %155 = arith.mulf %154, %153 : vector<8x16xf32>
    %cst_88 = arith.constant dense<0.000000e+00> : vector<8x16xf32>
    %156 = tpu.matmul %142, %151, %cst_88 {dimension_numbers = #tpu.dot_dimension_numbers<[1], [0], [0], [1], [0, 0, 1, 1], [], []>} : vector<8x8xf32>, vector<8x16xf32>, vector<8x16xf32> -> vector<8x16xf32>
    %157 = arith.addf %155, %156 : vector<8x16xf32>
    %c3_89 = arith.constant 3 : index
    %c0_90 = arith.constant 0 : index
    %c0_91 = arith.constant 0 : index
    %158 = vector.load %arg11[%c3_89, %c0_90, %c0_91] : memref<4x8x16xf32, #tpu.memory_space<vmem>>, vector<1x8x16xf32>
    %159 = vector.shape_cast %158 : vector<1x8x16xf32> to vector<8x16xf32>
    %160 = vector.shape_cast %157 : vector<8x16xf32> to vector<1x8x16xf32>
    tpu.vector_store %arg11[%c3_89, %c0_90, %c0_91], %160 {strides = array<i32>} : memref<4x8x16xf32, #tpu.memory_space<vmem>>, vector<1x8x16xf32>,
    %c3_92 = arith.constant 3 : index
    %c0_93 = arith.constant 0 : index
    %c0_94 = arith.constant 0 : index
    %161 = vector.load %arg9[%c3_92, %c0_93, %c0_94] : memref<4x8x1xf32, #tpu.memory_space<vmem>>, vector<1x8x1xf32>
    %162 = vector.shape_cast %161 : vector<1x8x1xf32> to vector<8x1xf32>
    %163 = vector.shape_cast %137 : vector<8x1xf32> to vector<1x8x1xf32>
    tpu.vector_store %arg9[%c3_92, %c0_93, %c0_94], %163 {strides = array<i32>} : memref<4x8x1xf32, #tpu.memory_space<vmem>>, vector<1x8x1xf32>,
    %c2_i32 = arith.constant 2 : i32
    %164 = arith.cmpi eq, %arg1, %c2_i32 : i32
    %165 = arith.extui %164 : i1 to i32
    %c0_i32_95 = arith.constant 0 : i32
    %166 = arith.cmpi ne, %165, %c0_i32_95 : i32
    scf.if %166 {
      %c0_96 = arith.constant 0 : index
      %c0_97 = arith.constant 0 : index
      %167 = vector.load %arg6[%c0_96, %c0_97] : memref<64x32xbf16, #tpu.memory_space<vmem>>, vector<64x32xbf16>
      %cst_98 = arith.constant 0.000000e+00 : f32
      %168 = vector.broadcast %cst_98 : f32 to vector<8x32xf32>
      %c0_99 = arith.constant 0 : index
      %c0_100 = arith.constant 0 : index
      %c0_101 = arith.constant 0 : index
      %169 = vector.load %arg11[%c0_99, %c0_100, %c0_101] : memref<4x8x16xf32, #tpu.memory_space<vmem>>, vector<1x8x16xf32>
      %170 = vector.shape_cast %169 : vector<1x8x16xf32> to vector<8x16xf32>
      %c0_102 = arith.constant 0 : index
      %c0_103 = arith.constant 0 : index
      %c0_104 = arith.constant 0 : index
      %171 = vector.load %arg10[%c0_102, %c0_103, %c0_104] : memref<4x8x1xf32, #tpu.memory_space<vmem>>, vector<1x8x1xf32>
      %172 = vector.shape_cast %171 : vector<1x8x1xf32> to vector<8x1xf32>
      %173 = vector.broadcast %172 : vector<8x1xf32> to vector<8x16xf32>
      %174 = arith.divf %170, %173 : vector<8x16xf32>
      %175 = arith.truncf %174 : vector<8x16xf32> to vector<8x16xbf16>
      %176 = vector.extract_strided_slice %167 {offsets = [0, 0], sizes = [16, 32], strides = [1, 1]} : vector<64x32xbf16> to vector<16x32xbf16>
      %cst_105 = arith.constant dense<0.000000e+00> : vector<8x32xf32>
      %177 = tpu.matmul %175, %176, %cst_105 {dimension_numbers = #tpu.dot_dimension_numbers<[1], [0], [0], [1], [0, 0, 1, 1], [], []>} : vector<8x16xbf16>, vector<16x32xbf16>, vector<8x32xf32> -> vector<8x32xf32>
      %178 = arith.addf %168, %177 : vector<8x32xf32>
      %c1_106 = arith.constant 1 : index
      %c0_107 = arith.constant 0 : index
      %c0_108 = arith.constant 0 : index
      %179 = vector.load %arg11[%c1_106, %c0_107, %c0_108] : memref<4x8x16xf32, #tpu.memory_space<vmem>>, vector<1x8x16xf32>
      %180 = vector.shape_cast %179 : vector<1x8x16xf32> to vector<8x16xf32>
      %c1_109 = arith.constant 1 : index
      %c0_110 = arith.constant 0 : index
      %c0_111 = arith.constant 0 : index
      %181 = vector.load %arg10[%c1_109, %c0_110, %c0_111] : memref<4x8x1xf32, #tpu.memory_space<vmem>>, vector<1x8x1xf32>
      %182 = vector.shape_cast %181 : vector<1x8x1xf32> to vector<8x1xf32>
      %183 = vector.broadcast %182 : vector<8x1xf32> to vector<8x16xf32>
      %184 = arith.divf %180, %183 : vector<8x16xf32>
      %185 = arith.truncf %184 : vector<8x16xf32> to vector<8x16xbf16>
      %186 = vector.extract_strided_slice %167 {offsets = [16, 0], sizes = [16, 32], strides = [1, 1]} : vector<64x32xbf16> to vector<16x32xbf16>
      %cst_112 = arith.constant dense<0.000000e+00> : vector<8x32xf32>
      %187 = tpu.matmul %185, %186, %cst_112 {dimension_numbers = #tpu.dot_dimension_numbers<[1], [0], [0], [1], [0, 0, 1, 1], [], []>} : vector<8x16xbf16>, vector<16x32xbf16>, vector<8x32xf32> -> vector<8x32xf32>
      %188 = arith.addf %178, %187 : vector<8x32xf32>
      %c2_113 = arith.constant 2 : index
      %c0_114 = arith.constant 0 : index
      %c0_115 = arith.constant 0 : index
      %189 = vector.load %arg11[%c2_113, %c0_114, %c0_115] : memref<4x8x16xf32, #tpu.memory_space<vmem>>, vector<1x8x16xf32>
      %190 = vector.shape_cast %189 : vector<1x8x16xf32> to vector<8x16xf32>
      %c2_116 = arith.constant 2 : index
      %c0_117 = arith.constant 0 : index
      %c0_118 = arith.constant 0 : index
      %191 = vector.load %arg10[%c2_116, %c0_117, %c0_118] : memref<4x8x1xf32, #tpu.memory_space<vmem>>, vector<1x8x1xf32>
      %192 = vector.shape_cast %191 : vector<1x8x1xf32> to vector<8x1xf32>
      %193 = vector.broadcast %192 : vector<8x1xf32> to vector<8x16xf32>
      %194 = arith.divf %190, %193 : vector<8x16xf32>
      %195 = arith.truncf %194 : vector<8x16xf32> to vector<8x16xbf16>
      %196 = vector.extract_strided_slice %167 {offsets = [32, 0], sizes = [16, 32], strides = [1, 1]} : vector<64x32xbf16> to vector<16x32xbf16>
      %cst_119 = arith.constant dense<0.000000e+00> : vector<8x32xf32>
      %197 = tpu.matmul %195, %196, %cst_119 {dimension_numbers = #tpu.dot_dimension_numbers<[1], [0], [0], [1], [0, 0, 1, 1], [], []>} : vector<8x16xbf16>, vector<16x32xbf16>, vector<8x32xf32> -> vector<8x32xf32>
      %198 = arith.addf %188, %197 : vector<8x32xf32>
      %c3_120 = arith.constant 3 : index
      %c0_121 = arith.constant 0 : index
      %c0_122 = arith.constant 0 : index
      %199 = vector.load %arg11[%c3_120, %c0_121, %c0_122] : memref<4x8x16xf32, #tpu.memory_space<vmem>>, vector<1x8x16xf32>
      %200 = vector.shape_cast %199 : vector<1x8x16xf32> to vector<8x16xf32>
      %c3_123 = arith.constant 3 : index
      %c0_124 = arith.constant 0 : index
      %c0_125 = arith.constant 0 : index
      %201 = vector.load %arg10[%c3_123, %c0_124, %c0_125] : memref<4x8x1xf32, #tpu.memory_space<vmem>>, vector<1x8x1xf32>
      %202 = vector.shape_cast %201 : vector<1x8x1xf32> to vector<8x1xf32>
      %203 = vector.broadcast %202 : vector<8x1xf32> to vector<8x16xf32>
      %204 = arith.divf %200, %203 : vector<8x16xf32>
      %205 = arith.truncf %204 : vector<8x16xf32> to vector<8x16xbf16>
      %206 = vector.extract_strided_slice %167 {offsets = [48, 0], sizes = [16, 32], strides = [1, 1]} : vector<64x32xbf16> to vector<16x32xbf16>
      %cst_126 = arith.constant dense<0.000000e+00> : vector<8x32xf32>
      %207 = tpu.matmul %205, %206, %cst_126 {dimension_numbers = #tpu.dot_dimension_numbers<[1], [0], [0], [1], [0, 0, 1, 1], [], []>} : vector<8x16xbf16>, vector<16x32xbf16>, vector<8x32xf32> -> vector<8x32xf32>
      %208 = arith.addf %198, %207 : vector<8x32xf32>
      %c0_127 = arith.constant 0 : index
      %c0_128 = arith.constant 0 : index
      %209 = vector.load %arg7[%c0_127, %c0_128] : memref<8x32xf32, #tpu.memory_space<vmem>>, vector<8x32xf32>
      tpu.vector_store %arg7[%c0_127, %c0_128], %208 {strides = array<i32>} : memref<8x32xf32, #tpu.memory_space<vmem>>, vector<8x32xf32>,
    } else {
    }
    return
  }
  func.func @transform_0(%arg0: i32, %arg1: i32) -> (i32, i32) {
    %c0_i32 = arith.constant 0 : i32
    %c0_i32_0 = arith.constant 0 : i32
    return %arg0, %c0_i32 : i32, i32
  }
  func.func @transform_1(%arg0: i32, %arg1: i32) -> (i32, i32) {
    %c0_i32 = arith.constant 0 : i32
    %c0_i32_0 = arith.constant 0 : i32
    return %arg1, %c0_i32 : i32, i32
  }
  func.func @transform_2(%arg0: i32, %arg1: i32) -> (i32, i32) {
    %c0_i32 = arith.constant 0 : i32
    %c0_i32_0 = arith.constant 0 : i32
    %c0_i32_1 = arith.constant 0 : i32
    return %c0_i32, %c0_i32_0 : i32, i32
  }
  func.func @transform_3(%arg0: i32, %arg1: i32) -> (i32, i32) {
    %c0_i32 = arith.constant 0 : i32
    %c0_i32_0 = arith.constant 0 : i32
    %c0_i32_1 = arith.constant 0 : i32
    return %c0_i32, %c0_i32_0 : i32, i32
  }
  func.func @transform_4(%arg0: i32, %arg1: i32) -> (i32, i32) {
    %c0_i32 = arith.constant 0 : i32
    %c0_i32_0 = arith.constant 0 : i32
    %c0_i32_1 = arith.constant 0 : i32
    return %c0_i32, %c0_i32_0 : i32, i32
  }
  func.func @transform_5(%arg0: i32, %arg1: i32) -> (i32, i32) {
    %c0_i32 = arith.constant 0 : i32
    %c0_i32_0 = arith.constant 0 : i32
    return %arg0, %c0_i32 : i32, i32
  }
}

</mosaic_0001>

<llo_original>
// kernel: tpu_custom_call.1
$region0: #{tpu_custom_call.1}
  #allocation0 [shape = 'u32[]', space=smem, size = 0x4, offset = 0x4, fixed_abs, tag = 'smem constant byte address 0x4 - core index']
  #allocation1 [shape = 'u32[144,128]{1,0:T(1,128)}', space=vmem, size = 0x12000, scoped, tag = 'internal scratch']
  #allocation2 [shape = 'bf16[8,64]{1,0:T(8,128)(2,1)}', space=vmem, size = 0x800, scoped, tag = 'scratch operand']
  #allocation3 [shape = 'f32[4,8,1]{2,1,0:T(8,128)}', space=vmem, size = 0x4000, scoped, tag = 'scratch operand']
  #allocation4 [shape = 'f32[4,8,1]{2,1,0:T(8,128)}', space=vmem, size = 0x4000, scoped, tag = 'scratch operand']
  #allocation5 [shape = 'f32[4,8,16]{2,1,0:T(8,128)}', space=vmem, size = 0x4000, scoped, tag = 'scratch operand']
  %s0 = inlined_call_operand.hbm [shape: bf16[16,32], index: 0, kind: input, shape index: {}]
  %s1 = inlined_call_operand.vmem [shape: bf16[24,32], index: 1, kind: input, shape index: {}]
  %s2 = inlined_call_operand.vmem [shape: bf16[32,64], index: 2, kind: input, shape index: {}]
  %s3 = inlined_call_operand.vmem [shape: bf16[32,128], index: 3, kind: input, shape index: {}]
  %s4 = inlined_call_operand.vmem [shape: bf16[64,32], index: 4, kind: input, shape index: {}]
  %s5 = inlined_call_operand.hbm [shape: f32[16,32], index: 5, kind: output, shape index: {}]
  %s6 = sld [smem:[#allocation0]]
  $region65: #{tpu_custom_call.1} parent=0
    _
  %s8 = ssub.s32 1, %s6
  %s9 = scalar_select 0, %s8, %s6
  $region1: #{tpu_custom_call.1} parent=0
    #allocation6 [shape = 'u8[4096]{0}', space=vmem, size = 0x1000, scoped, tag = 'input window, operand 0']
    #allocation7 [shape = 's32[2]{0}', space=sflag, size = 0x8, scoped, tag = 'scoped memory for tpu_custom_call.1']
    #allocation8 [shape = 's32[2]{0}', space=sflag, size = 0x8, scoped, tag = 'scoped memory for tpu_custom_call.1']
    #allocation9 [shape = 'u8[8192]{0}', space=vmem, size = 0x2000, scoped, tag = 'output window, operand 0']
    %10 = vsyncpa [#allocation7], 0
    %s11 = scalar_lea.sflag [#allocation7], 1
    %12 = vsyncpa %s11, 0
    %13 = vsyncpa [#allocation8], 0
    %s14 = scalar_lea.sflag [#allocation8], 1
    %15 = vsyncpa %s14, 0
    loop: start=0, step=1, limit=8
    $region2: #{tpu_custom_call.1} parent=1 // loop_pre_header
      _
    $region3: #{tpu_custom_call.1} parent=1 // loop_header
      %s17 = sphi 0, %s21
      %p18 = scmp.ge.s32.totalorder %s17, 8
      %s24 = sphi 0, %s36
      %s25 = sphi 0, %s32
      %s26 = sphi 0, %s24
      %s27 = sphi 0, %s25
      %s28 = sphi 0, %s26
      %s29 = sphi 0, %s27
      %s39 = sphi 0, %s41
      %s42 = sphi 0, %s39
      %s43 = sphi 0, %s42
      %s59 = sphi 0, %s43
      %s65 = sphi 0, %s67
      %s68 = sphi 0, %s65
      %s69 = sphi 0, %s68
      %s85 = sphi 0, %s69
      %s89 = sphi 0, %s89
      %s91 = sphi 0, %s89
      %s92 = sphi 0, %s91
      %s106 = sphi 0, %s92
      %s110 = sphi 0, %s110
      %s112 = sphi 0, %s110
      %s113 = sphi 0, %s112
      %s127 = sphi 0, %s113
      %s131 = sphi 0, %s131
      %s133 = sphi 0, %s131
      %s134 = sphi 0, %s133
      %s148 = sphi 0, %s134
      %s154 = sphi 0, %s156
      %s157 = sphi 0, %s154
      %s158 = sphi 0, %s157
      %s174 = sphi 0, %s158
    $region4: #{tpu_custom_call.1} parent=1 // loop_header_branch
      %20 = sbr.rel (%p18) target = $region8
    $region5: #{tpu_custom_call.1} parent=1 // loop_body
      %s22 = ssub.s32 %s17, 1
      %s23 = ssub.s32 %s17, 2
      %s30 = sadd.s32 1, %s25
      %p31 = scmp.ge.s32.totalorder %s30, 3
      %s32 = scalar_select %p31, 0, %s30
      %s33 = sadd.s32 1, %s24
      %s34 = scalar_select %p31, %s33, %s24
      %p35 = scmp.ge.s32.totalorder %s34, 2
      %s36 = scalar_select %p35, 0, %s34
      %s37 = ssub.s32 %s24, %s36
      %p38 = scmp.eq.s32.totalorder %s37, 0
      %s40 = sadd.s32 %s39, 1
      %s41 = scalar_select %p38, %s39, %s40
      %p44 = pneg %p38
      %p45 = scmp.eq.s32.totalorder %s17, 5
      %p46 = por %p44, %p45
      %p47 = scmp.ne.s32.totalorder %s39, %s42
      %p48 = scmp.eq.s32.totalorder %s17, 0
      %p49 = por %p47, %p48
      %p50 = scmp.ne.s32.totalorder %s39, %s42
      %p51 = scmp.eq.s32.totalorder %s22, 5
      %p52 = por %p50, %p51
      %p53 = scmp.ne.s32.totalorder %s42, %s43
      %p54 = scmp.eq.s32.totalorder %s22, 0
      %p55 = por %p53, %p54
      %p56 = scmp.ne.s32.totalorder %s42, %s43
      %p57 = scmp.eq.s32.totalorder %s23, 5
      %p58 = por %p56, %p57
      %p60 = scmp.ne.s32.totalorder %s43, %s59
      %p61 = scmp.eq.s32.totalorder %s23, 0
      %p62 = por %p60, %p61
      %s63 = ssub.s32 %s25, %s32
      %p64 = scmp.eq.s32.totalorder %s63, 0
      %s66 = sadd.s32 %s65, 1
      %s67 = scalar_select %p64, %s65, %s66
      %p70 = pneg %p64
      %p71 = scmp.eq.s32.totalorder %s17, 5
      %p72 = por %p70, %p71
      %p73 = scmp.ne.s32.totalorder %s65, %s68
      %p74 = scmp.eq.s32.totalorder %s17, 0
      %p75 = por %p73, %p74
      %p76 = scmp.ne.s32.totalorder %s65, %s68
      %p77 = scmp.eq.s32.totalorder %s22, 5
      %p78 = por %p76, %p77
      %p79 = scmp.ne.s32.totalorder %s68, %s69
      %p80 = scmp.eq.s32.totalorder %s22, 0
      %p81 = por %p79, %p80
      %p82 = scmp.ne.s32.totalorder %s68, %s69
      %p83 = scmp.eq.s32.totalorder %s23, 5
      %p84 = por %p82, %p83
      %p86 = scmp.ne.s32.totalorder %s69, %s85
      %p87 = scmp.eq.s32.totalorder %s23, 0
      %p88 = por %p86, %p87
      %s90 = sadd.s32 %s89, 1
      %p93 = scmp.eq.s32.totalorder %s17, 5
      %p94 = scmp.ne.s32.totalorder %s89, %s91
      %p95 = scmp.eq.s32.totalorder %s17, 0
      %p96 = por %p94, %p95
      %p97 = scmp.ne.s32.totalorder %s89, %s91
      %p98 = scmp.eq.s32.totalorder %s22, 5
      %p99 = por %p97, %p98
      %p100 = scmp.ne.s32.totalorder %s91, %s92
      %p101 = scmp.eq.s32.totalorder %s22, 0
      %p102 = por %p100, %p101
      %p103 = scmp.ne.s32.totalorder %s91, %s92
      %p104 = scmp.eq.s32.totalorder %s23, 5
      %p105 = por %p103, %p104
      %p107 = scmp.ne.s32.totalorder %s92, %s106
      %p108 = scmp.eq.s32.totalorder %s23, 0
      %p109 = por %p107, %p108
      %s111 = sadd.s32 %s110, 1
      %p114 = scmp.eq.s32.totalorder %s17, 5
      %p115 = scmp.ne.s32.totalorder %s110, %s112
      %p116 = scmp.eq.s32.totalorder %s17, 0
      %p117 = por %p115, %p116
      %p118 = scmp.ne.s32.totalorder %s110, %s112
      %p119 = scmp.eq.s32.totalorder %s22, 5
      %p120 = por %p118, %p119
      %p121 = scmp.ne.s32.totalorder %s112, %s113
      %p122 = scmp.eq.s32.totalorder %s22, 0
      %p123 = por %p121, %p122
      %p124 = scmp.ne.s32.totalorder %s112, %s113
      %p125 = scmp.eq.s32.totalorder %s23, 5
      %p126 = por %p124, %p125
      %p128 = scmp.ne.s32.totalorder %s113, %s127
      %p129 = scmp.eq.s32.totalorder %s23, 0
      %p130 = por %p128, %p129
      %s132 = sadd.s32 %s131, 1
      %p135 = scmp.eq.s32.totalorder %s17, 5
      %p136 = scmp.ne.s32.totalorder %s131, %s133
      %p137 = scmp.eq.s32.totalorder %s17, 0
      %p138 = por %p136, %p137
      %p139 = scmp.ne.s32.totalorder %s131, %s133
      %p140 = scmp.eq.s32.totalorder %s22, 5
      %p141 = por %p139, %p140
      %p142 = scmp.ne.s32.totalorder %s133, %s134
      %p143 = scmp.eq.s32.totalorder %s22, 0
      %p144 = por %p142, %p143
      %p145 = scmp.ne.s32.totalorder %s133, %s134
      %p146 = scmp.eq.s32.totalorder %s23, 5
      %p147 = por %p145, %p146
      %p149 = scmp.ne.s32.totalorder %s134, %s148
      %p150 = scmp.eq.s32.totalorder %s23, 0
      %p151 = por %p149, %p150
      %s152 = ssub.s32 %s24, %s36
      %p153 = scmp.eq.s32.totalorder %s152, 0
      %s155 = sadd.s32 %s154, 1
      %s156 = scalar_select %p153, %s154, %s155
      %p159 = pneg %p153
      %p160 = scmp.eq.s32.totalorder %s17, 5
      %p161 = por %p159, %p160
      %p162 = scmp.ne.s32.totalorder %s154, %s157
      %p163 = scmp.eq.s32.totalorder %s17, 0
      %p164 = por %p162, %p163
      %p165 = scmp.ne.s32.totalorder %s154, %s157
      %p166 = scmp.eq.s32.totalorder %s22, 5
      %p167 = por %p165, %p166
      %p168 = scmp.ne.s32.totalorder %s157, %s158
      %p169 = scmp.eq.s32.totalorder %s22, 0
      %p170 = por %p168, %p169
      %p171 = scmp.ne.s32.totalorder %s157, %s158
      %p172 = scmp.eq.s32.totalorder %s23, 5
      %p173 = por %p171, %p172
      %p175 = scmp.ne.s32.totalorder %s158, %s174
      %p176 = scmp.eq.s32.totalorder %s23, 0
      %p177 = por %p175, %p176
      %p178 = scmp.le.s32.totalorder 1, %s17
      %p179 = scmp.lt.s32.totalorder %s17, 7
      %p180 = pnand %p178, %p179
      %p181 = pneg %p180
      // Predicated region
      $region9: #{tpu_custom_call.1} parent=5 // pred_check
        _
      $region10: #{tpu_custom_call.1} parent=5 // pred_check_branch
        %183 = sbr.rel (%p180) target = $region12
      $region11: #{tpu_custom_call.1} parent=5 // pred_region
        %s184 = ssub.s32 %s17, 1
        // Predicated region
        $region13: #{tpu_custom_call.1} parent=11 // pred_check
          %p185 = pneg %p102
        $region14: #{tpu_custom_call.1} parent=11 // pred_check_branch
          %187 = sbr.rel (%p185) target = $region16
        $region15: #{tpu_custom_call.1} parent=11 // pred_region
          _
        $region16: #{tpu_custom_call.1} parent=11 // pred_fallthru
          _
        // Predicated region
        $region17: #{tpu_custom_call.1} parent=11 // pred_check
          %p188 = pneg %p123
        $region18: #{tpu_custom_call.1} parent=11 // pred_check_branch
          %190 = sbr.rel (%p188) target = $region20
        $region19: #{tpu_custom_call.1} parent=11 // pred_region
          _
        $region20: #{tpu_custom_call.1} parent=11 // pred_fallthru
          _
        // Predicated region
        $region21: #{tpu_custom_call.1} parent=11 // pred_check
          %p191 = pneg %p144
        $region22: #{tpu_custom_call.1} parent=11 // pred_check_branch
          %193 = sbr.rel (%p191) target = $region24
        $region23: #{tpu_custom_call.1} parent=11 // pred_region
          _
        $region24: #{tpu_custom_call.1} parent=11 // pred_fallthru
          _
      $region12: #{tpu_custom_call.1} parent=5 // pred_fallthru
        _
      %p194 = scmp.lt.s32.totalorder %s17, 6
      // Predicated region
      $region25: #{tpu_custom_call.1} parent=5 // pred_check
        %p195 = pneg %p194
      $region26: #{tpu_custom_call.1} parent=5 // pred_check_branch
        %197 = sbr.rel (%p195) target = $region28
      $region27: #{tpu_custom_call.1} parent=5 // pred_region
        // Predicated region
        $region29: #{tpu_custom_call.1} parent=27 // pred_check
          %p198 = pneg %p49
        $region30: #{tpu_custom_call.1} parent=27 // pred_check_branch
          %200 = sbr.rel (%p198) target = $region32
        $region31: #{tpu_custom_call.1} parent=27 // pred_region
          %s201 = sand.u32 %s39, 1
          %s202 = scalar_lea.sflag [#allocation7], %s201
          %s203 = sand.u32 %s39, 1
          %s204 = smul.addr %s203, 4
          %s205 = scalar_lea.vmem [#allocation6], %s204
          %s207 = ssub.s32 64, 64
          %208 = vsyncadd %s202, %s207
          %s209 = smul.addr %s24, 64
          %s210 = scalar_lea.hbm %s0, %s209
          %s212 = sshll.u32 %s205, 4
          %s213 = int_to_ptr.vmem [resolvable:$true] %s212
          %215 = dma.hbm_to_vmem [thread:$0]  %s210, 64, %s213, %s202
        $region32: #{tpu_custom_call.1} parent=27 // pred_fallthru
          _
        // Predicated region
        $region33: #{tpu_custom_call.1} parent=27 // pred_check
          %p216 = pneg %p75
        $region34: #{tpu_custom_call.1} parent=27 // pred_check_branch
          %218 = sbr.rel (%p216) target = $region36
        $region35: #{tpu_custom_call.1} parent=27 // pred_region
          %p219 = scmp.lt.s32.totalorder %s25, 2
          %s220 = scalar_select %p219, %s25, 2
          %s221 = smul.addr %s220, 4
          %s222 = scalar_lea.vmem %s1, %s221
        $region36: #{tpu_custom_call.1} parent=27 // pred_fallthru
          _
      $region28: #{tpu_custom_call.1} parent=5 // pred_fallthru
        _
      %p223 = scmp.le.s32.totalorder 1, %s17
      %p224 = scmp.lt.s32.totalorder %s17, 7
      %p225 = pnand %p223, %p224
      %p226 = pneg %p225
      // Predicated region
      $region37: #{tpu_custom_call.1} parent=5 // pred_check
        _
      $region38: #{tpu_custom_call.1} parent=5 // pred_check_branch
        %228 = sbr.rel (%p225) target = $region40
      $region39: #{tpu_custom_call.1} parent=5 // pred_region
        %s229 = ssub.s32 %s17, 1
        %s230 = sand.u32 %s42, 1
        %s231 = scalar_lea.sflag [#allocation7], %s230
        %s232 = sand.u32 %s42, 1
        %s233 = smul.addr %s232, 4
        %s234 = scalar_lea.vmem [#allocation6], %s233
        // Predicated region
        $region41: #{tpu_custom_call.1} parent=39 // pred_check
          %p235 = pneg %p55
        $region42: #{tpu_custom_call.1} parent=39 // pred_check_branch
          %237 = sbr.rel (%p235) target = $region44
        $region43: #{tpu_custom_call.1} parent=39 // pred_region
          %238 = dma.done %s231, 64
        $region44: #{tpu_custom_call.1} parent=39 // pred_fallthru
          _
        %s239 = sand.u32 %s42, 1
        %s240 = scalar_lea.sflag [#allocation7], %s239
        %s241 = sand.u32 %s42, 1
        %s242 = smul.addr %s241, 4
        %s243 = scalar_lea.vmem [#allocation6], %s242
        %p244 = pneg %p55
        %p245 = pneg %p52
        %p246 = scmp.lt.s32.totalorder %s27, 2
        %s247 = scalar_select %p246, %s27, 2
        %s248 = smul.addr %s247, 4
        %s249 = scalar_lea.vmem %s1, %s248
        %p250 = pneg %p81
        %p251 = pneg %p78
        %p252 = pneg %p102
        %p253 = pneg %p99
        %p254 = pneg %p123
        %p255 = pneg %p120
        %p256 = pneg %p144
        %p257 = pneg %p141
        %p258 = pneg %p170
        %p259 = pneg %p167
        %s260 = sand.u32 %s157, 1
        %s261 = scalar_lea.sflag [#allocation8], %s260
        %s262 = sand.u32 %s157, 1
        %s263 = smul.addr %s262, 8
        %s264 = scalar_lea.vmem [#allocation9], %s263
        %p265 = scmp.lt.s32.totalorder %s27, 2
        %s266 = scalar_select %p265, %s27, 2
        %s267 = smul.addr %s266, 4
        %s268 = scalar_lea.vmem %s1, %s267
        %p270 = scmp.eq.s32.totalorder %s27, 0
        // Predicated region
        $region45: #{tpu_custom_call.1} parent=39 // pred_check
          %p271 = pneg %p270
        $region46: #{tpu_custom_call.1} parent=39 // pred_check_branch
          %273 = sbr.rel (%p271) target = $region48
        $region47: #{tpu_custom_call.1} parent=39 // pred_region
          %vm274 = vcmask 7168
          %275 = vst.msk [vmem:[#allocation3] sm:$0xff] %vm274, -inf
          %276 = vst.msk [vmem:[#allocation3 + $0x8] sm:$0xff] %vm274, -inf
          %277 = vst.msk [vmem:[#allocation3 + $0x10] sm:$0xff] %vm274, -inf
          %278 = vst.msk [vmem:[#allocation3 + $0x18] sm:$0xff] %vm274, -inf
          %279 = vst.msk [vmem:[#allocation4] sm:$0xff] %vm274, 0.0
          %280 = vst.msk [vmem:[#allocation4 + $0x8] sm:$0xff] %vm274, 0.0
          %281 = vst.msk [vmem:[#allocation4 + $0x10] sm:$0xff] %vm274, 0.0
          %282 = vst.msk [vmem:[#allocation4 + $0x18] sm:$0xff] %vm274, 0.0
          %vm283 = vcmask 130048
          %284 = vst.msk [vmem:[#allocation5] sm:$0xff] %vm283, 0.0
          %285 = vst.msk [vmem:[#allocation5 + $0x8] sm:$0xff] %vm283, 0.0
          %286 = vst.msk [vmem:[#allocation5 + $0x10] sm:$0xff] %vm283, 0.0
          %287 = vst.msk [vmem:[#allocation5 + $0x18] sm:$0xff] %vm283, 0.0
          %v288 = vld [vmem:[%s234] sm:$0xf]
          %v289 = vld [vmem:[%s2] sm:$0xf]
          %v290 = vld [vmem:[%s2 + $0x4] sm:$0xf]
          %v291 = vld [vmem:[%s2 + $0x8] sm:$0xf]
          %v292 = vld [vmem:[%s2 + $0xc] sm:$0xf]
          %v297 = vunpack.c.l.b16 %v289
          %v298 = vunpack.c.l.b16 %v290
          %v299 = vunpack.c.l.b16 %v291
          %v300 = vunpack.c.l.b16 %v292
          %v301 = vpack.c.b16 %v298, %v297
          %v302 = vpack.c.b16 %v300, %v299
          %vm305 = vcmask 261120
          %v307 = vsel %vm305, %v288, 0
          %309 = vmatprep.subr.bf16.mxu0 0
          %310 = vmatpush1.bf16.msra.mxu0 0
          %311 = vmatprep.subr.bf16.mxu0 0
          %312 = vmatpush1.bf16.msra.mxu0 0
          %313 = vmatprep.subr.bf16.mxu0 0
          %314 = vmatpush1.bf16.msra.mxu0 0
          %315 = vmatprep.subr.bf16.mxu0 0
          %316 = vmatpush1.bf16.msra.mxu0 0
          %317 = vmatprep.subr.bf16.mxu0 0
          %318 = vmatpush1.bf16.msra.mxu0 0
          %319 = vmatprep.subr.bf16.mxu0 0
          %320 = vmatpush1.bf16.msra.mxu0 0
          %321 = vmatprep.subr.bf16.mxu0 0
          %322 = vmatpush1.bf16.msra.mxu0 %v302
          %323 = vmatprep.subr.bf16.mxu0 0
          %324 = vmatpush1.bf16.msra.mxu0 %v301
          %325 = vmatprep.subr.bf16.mxu0 0
          %326 = vmatpush2.bf16.msra.mxu0 0
          %327 = vmatprep.subr.bf16.mxu0 0
          %328 = vmatpush2.bf16.msra.mxu0 0
          %329 = vmatprep.subr.bf16.mxu0 0
          %330 = vmatpush2.bf16.msra.mxu0 0
          %331 = vmatprep.subr.bf16.mxu0 0
          %332 = vmatpush2.bf16.msra.mxu0 0
          %333 = vmatprep.subr.bf16.mxu0 0
          %334 = vmatpush2.bf16.msra.mxu0 0
          %335 = vmatprep.subr.bf16.mxu0 0
          %336 = vmatpush2.bf16.msra.mxu0 0
          %337 = vmatprep.subr.bf16.mxu0 0
          %338 = vmatpush2.bf16.msra.mxu0 0
          %339 = vmatprep.subr.bf16.mxu0 0
          %340 = vmatpush2.bf16.msra.mxu0 0
          %341 = vmatprep.mubr.bf16.mxu0 0
          %342 = vmatmul.mubr.bf16.gmra.mxu0 %v307
          %v343 = vpop.f32.mrf.mxu0
          %v344 = vadd.f32 0.0, %v343
          %v345 = vpop.f32.mrf.mxu0
          %v346 = vpop.f32.mrf.mxu0
          %v347 = vpop.f32.mrf.mxu0
          %348 = vdwg.mxu0
          %v349 = vpack.c.bf16 %v344, %v344
          %vm350 = vcmask 519168
          %351 = vst.msk [vmem:[#allocation2] sm:$0xf] %vm350, %v349
        $region48: #{tpu_custom_call.1} parent=39 // pred_fallthru
          _
        %v352 = vld [vmem:[%s268] sm:$0xf]
        %v353 = vld [vmem:[%s3] sm:$0xf]
        %v354 = vld [vmem:[%s3 + $0x4] sm:$0xf]
        %v355 = vld [vmem:[%s3 + $0x8] sm:$0xf]
        %v356 = vld [vmem:[%s3 + $0xc] sm:$0xf]
        %v361 = vunpack.c.l.b16 %v353
        %v362 = vunpack.c.l.b16 %v354
        %v363 = vunpack.c.l.b16 %v355
        %v364 = vunpack.c.l.b16 %v356
        %v365 = vpack.c.b16 %v362, %v361
        %v366 = vpack.c.b16 %v364, %v363
        %vm369 = vcmask 261120
        %v371 = vsel %vm369, %v352, 0
        %373 = vmatprep.subr.bf16.mxu0 0
        %374 = vmatpush1.bf16.msra.mxu0 0
        %375 = vmatprep.subr.bf16.mxu0 0
        %376 = vmatpush1.bf16.msra.mxu0 0
        %377 = vmatprep.subr.bf16.mxu0 0
        %378 = vmatpush1.bf16.msra.mxu0 0
        %379 = vmatprep.subr.bf16.mxu0 0
        %380 = vmatpush1.bf16.msra.mxu0 0
        %381 = vmatprep.subr.bf16.mxu0 0
        %382 = vmatpush1.bf16.msra.mxu0 0
        %383 = vmatprep.subr.bf16.mxu0 0
        %384 = vmatpush1.bf16.msra.mxu0 0
        %385 = vmatprep.subr.bf16.mxu0 0
        %386 = vmatpush1.bf16.msra.mxu0 %v366
        %387 = vmatprep.subr.bf16.mxu0 0
        %388 = vmatpush1.bf16.msra.mxu0 %v365
        %389 = vmatprep.subr.bf16.mxu0 0
        %390 = vmatpush2.bf16.msra.mxu0 0
        %391 = vmatprep.subr.bf16.mxu0 0
        %392 = vmatpush2.bf16.msra.mxu0 0
        %393 = vmatprep.subr.bf16.mxu0 0
        %394 = vmatpush2.bf16.msra.mxu0 0
        %395 = vmatprep.subr.bf16.mxu0 0
        %396 = vmatpush2.bf16.msra.mxu0 0
        %397 = vmatprep.subr.bf16.mxu0 0
        %398 = vmatpush2.bf16.msra.mxu0 0
        %399 = vmatprep.subr.bf16.mxu0 0
        %400 = vmatpush2.bf16.msra.mxu0 0
        %401 = vmatprep.subr.bf16.mxu0 0
        %402 = vmatpush2.bf16.msra.mxu0 0
        %403 = vmatprep.subr.bf16.mxu0 0
        %404 = vmatpush2.bf16.msra.mxu0 0
        %405 = vmatprep.mubr.bf16.mxu0 0
        %406 = vmatmul.mubr.bf16.gmra.mxu0 %v371
        %v407 = vpop.f32.mrf.mxu0
        %v408 = vadd.f32 0.0, %v407
        %v409 = vpop.f32.mrf.mxu0
        %v410 = vpop.f32.mrf.mxu0
        %v411 = vpop.f32.mrf.mxu0
        %412 = vdwg.mxu0
        %413 = vxpose.xlu0.b32.start [1/16] %v408, 128
        %414 = vxpose.xlu0.b32.cont [2/16] 0.0, 128
        %415 = vxpose.xlu0.b32.cont [3/16] 0.0, 128
        %416 = vxpose.xlu0.b32.cont [4/16] 0.0, 128
        %417 = vxpose.xlu0.b32.cont [5/16] 0.0, 128
        %418 = vxpose.xlu0.b32.cont [6/16] 0.0, 128
        %419 = vxpose.xlu0.b32.cont [7/16] 0.0, 128
        %420 = vxpose.xlu0.b32.cont [8/16] 0.0, 128
        %421 = vxpose.xlu0.b32.cont [9/16] 0.0, 128
        %422 = vxpose.xlu0.b32.cont [10/16] 0.0, 128
        %423 = vxpose.xlu0.b32.cont [11/16] 0.0, 128
        %424 = vxpose.xlu0.b32.cont [12/16] 0.0, 128
        %425 = vxpose.xlu0.b32.cont [13/16] 0.0, 128
        %426 = vxpose.xlu0.b32.cont [14/16] 0.0, 128
        %427 = vxpose.xlu0.b32.cont [15/16] 0.0, 128
        %428 = vxpose.xlu0.b32.end [16/16] 0.0, 128
        %v429 = vpop.trf.xlu0
        %v430 = vpop.trf.xlu0
        %v431 = vpop.trf.xlu0
        %v432 = vpop.trf.xlu0
        %v433 = vpop.trf.xlu0
        %v434 = vpop.trf.xlu0
        %v435 = vpop.trf.xlu0
        %v436 = vpop.trf.xlu0
        %v437 = vpop.trf.xlu0
        %v438 = vpop.trf.xlu0
        %v439 = vpop.trf.xlu0
        %v440 = vpop.trf.xlu0
        %v441 = vpop.trf.xlu0
        %v442 = vpop.trf.xlu0
        %v443 = vpop.trf.xlu0
        %v444 = vpop.trf.xlu0
        %v445 = vpack.c.bf16 %v430, %v429
        %v446 = vpack.c.bf16 %v432, %v431
        %v447 = vpack.c.bf16 %v434, %v433
        %v448 = vpack.c.bf16 %v436, %v435
        %v449 = vpack.c.bf16 %v408, %v408
        %v450 = vld [vmem:[#allocation2] sm:$0xf]
        %vm451 = vcmask 130048
        %v453 = vsel %vm451, %v450, 0
        %455 = vmatprep.subr.bf16.mxu0 0
        %456 = vmatpush1.bf16.msra.mxu0 0
        %457 = vmatprep.subr.bf16.mxu0 0
        %458 = vmatpush1.bf16.msra.mxu0 0
        %459 = vmatprep.subr.bf16.mxu0 0
        %460 = vmatpush1.bf16.msra.mxu0 0
        %461 = vmatprep.subr.bf16.mxu0 0
        %462 = vmatpush1.bf16.msra.mxu0 0
        %463 = vmatprep.subr.bf16.mxu0 0
        %464 = vmatpush1.bf16.msra.mxu0 0
        %465 = vmatprep.subr.bf16.mxu0 0
        %466 = vmatpush1.bf16.msra.mxu0 0
        %467 = vmatprep.subr.bf16.mxu0 0
        %468 = vmatpush1.bf16.msra.mxu0 0
        %469 = vmatprep.subr.bf16.mxu0 0
        %470 = vmatpush1.bf16.msra.mxu0 %v445
        %471 = vmatprep.subr.bf16.mxu0 0
        %472 = vmatpush2.bf16.msra.mxu0 0
        %473 = vmatprep.subr.bf16.mxu0 0
        %474 = vmatpush2.bf16.msra.mxu0 0
        %475 = vmatprep.subr.bf16.mxu0 0
        %476 = vmatpush2.bf16.msra.mxu0 0
        %477 = vmatprep.subr.bf16.mxu0 0
        %478 = vmatpush2.bf16.msra.mxu0 0
        %479 = vmatprep.subr.bf16.mxu0 0
        %480 = vmatpush2.bf16.msra.mxu0 0
        %481 = vmatprep.subr.bf16.mxu0 0
        %482 = vmatpush2.bf16.msra.mxu0 0
        %483 = vmatprep.subr.bf16.mxu0 0
        %484 = vmatpush2.bf16.msra.mxu0 0
        %485 = vmatprep.subr.bf16.mxu0 0
        %486 = vmatpush2.bf16.msra.mxu0 0
        %487 = vmatprep.mubr.bf16.mxu0 0
        %488 = vmatmul.mubr.bf16.gmra.mxu0 %v453
        %v489 = vpop.f32.mrf.mxu0
        %v490 = vadd.f32 0.0, %v489
        %v491 = vpop.f32.mrf.mxu0
        %v492 = vpop.f32.mrf.mxu0
        %v493 = vpop.f32.mrf.mxu0
        %494 = vdwg.mxu0
        %v495 = vmul.f32 %v490, 0.25
        %v496 = vld [vmem:[#allocation3] sm:$0xff]
        %v497 = vld [vmem:[#allocation4] sm:$0xff]
        %vm498 = vcmask 64512
        %v499 = vsel %vm498, %v495, -inf
        %500 = vmax.xlane.f32.xlu0 %v499
        %v501 = vpop.xlane.xlu0 %500
        %v502 = vmax.f32 %v496, %v501
        %v503 = vsub.f32 %v496, %v502
        %v504 = vmul.f32 %v503, 1.442695
        %v505 = vpow.pop %v504
        %507 = vset.pattern.permute.xlu0 0
        %508 = vperm.xlu0 %507, %v502
        %v509 = vpop.permute.xlu0 %508
        %v511 = vsub.f32 %v495, %v509
        %v512 = vmul.f32 %v511, 1.442695
        %v513 = vpow.pop %v512
        %v514 = vmul.f32 %v505, %v497
        %v515 = vsel %vm498, %v513, 0.0
        %516 = vadd.xlane.f32.xlu0 %v515
        %v517 = vpop.xlane.xlu0 %516
        %v518 = vadd.f32 %v514, %v517
        %vm519 = vcmask 7168
        %520 = vst.msk [vmem:[#allocation4] sm:$0xff] %vm519, %v518
        %v521 = vunpack.c.l.bf16 %v449
        %v522 = vld [vmem:[#allocation5] sm:$0xff]
        %524 = vset.pattern.permute.xlu0 0
        %525 = vperm.xlu0 %524, %v505
        %v526 = vpop.permute.xlu0 %525
        %v528 = vmul.f32 %v526, %v522
        %530 = vrot.lane.b32.xlu0 %v521, 64
        %v531 = vpop.permute.xlu0 %530
        %v534 = vsel %vm498, %v513, 0
        %536 = vmatprep.subr.mxu0 0.0
        %537 = vmatpush1.msra.mxu0 0.0
        %538 = vmatprep.subr.mxu0 0.0
        %539 = vmatpush1.msra.mxu0 0.0
        %540 = vmatprep.subr.mxu0 0.0
        %541 = vmatpush1.msra.mxu0 0.0
        %542 = vmatprep.subr.mxu0 0.0
        %543 = vmatpush1.msra.mxu0 0.0
        %544 = vmatprep.subr.mxu0 0.0
        %545 = vmatpush1.msra.mxu0 0.0
        %546 = vmatprep.subr.mxu0 0.0
        %547 = vmatpush1.msra.mxu0 0.0
        %548 = vmatprep.subr.mxu0 0.0
        %549 = vmatpush1.msra.mxu0 0.0
        %550 = vmatprep.subr.mxu0 0.0
        %551 = vmatpush1.msra.mxu0 0.0
        %552 = vmatprep.subr.mxu0 0.0
        %553 = vmatpush1.msra.mxu0 0.0
        %554 = vmatprep.subr.mxu0 0.0
        %555 = vmatpush1.msra.mxu0 0.0
        %556 = vmatprep.subr.mxu0 0.0
        %557 = vmatpush1.msra.mxu0 0.0
        %558 = vmatprep.subr.mxu0 0.0
        %559 = vmatpush1.msra.mxu0 0.0
        %560 = vmatprep.subr.mxu0 0.0
        %561 = vmatpush1.msra.mxu0 0.0
        %562 = vmatprep.subr.mxu0 0.0
        %563 = vmatpush1.msra.mxu0 0.0
        %564 = vmatprep.subr.mxu0 0.0
        %565 = vmatpush1.msra.mxu0 0.0
        %566 = vmatprep.subr.mxu0 0.0
        %567 = vmatpush1.msra.mxu0 %v531
        %568 = vmatprep.subr.mxu0 0.0
        %569 = vmatpush2.msra.mxu0 0.0
        %570 = vmatprep.subr.mxu0 0.0
        %571 = vmatpush2.msra.mxu0 0.0
        %572 = vmatprep.subr.mxu0 0.0
        %573 = vmatpush2.msra.mxu0 0.0
        %574 = vmatprep.subr.mxu0 0.0
        %575 = vmatpush2.msra.mxu0 0.0
        %576 = vmatprep.subr.mxu0 0.0
        %577 = vmatpush2.msra.mxu0 0.0
        %578 = vmatprep.subr.mxu0 0.0
        %579 = vmatpush2.msra.mxu0 0.0
        %580 = vmatprep.subr.mxu0 0.0
        %581 = vmatpush2.msra.mxu0 0.0
        %582 = vmatprep.subr.mxu0 0.0
        %583 = vmatpush2.msra.mxu0 0.0
        %584 = vmatprep.subr.mxu0 0.0
        %585 = vmatpush2.msra.mxu0 0.0
        %586 = vmatprep.subr.mxu0 0.0
        %587 = vmatpush2.msra.mxu0 0.0
        %588 = vmatprep.subr.mxu0 0.0
        %589 = vmatpush2.msra.mxu0 0.0
        %590 = vmatprep.subr.mxu0 0.0
        %591 = vmatpush2.msra.mxu0 0.0
        %592 = vmatprep.subr.mxu0 0.0
        %593 = vmatpush2.msra.mxu0 0.0
        %594 = vmatprep.subr.mxu0 0.0
        %595 = vmatpush2.msra.mxu0 0.0
        %596 = vmatprep.subr.mxu0 0.0
        %597 = vmatpush2.msra.mxu0 0.0
        %598 = vmatprep.subr.mxu0 0.0
        %599 = vmatpush2.msra.mxu0 0.0
        %600 = vmatprep.mubr.f32.mxu0 0.0
        %601 = vmatmul.mubr.f32.gmra.mxu0 %v534
        %v602 = vpop.f32.mrf.mxu0
        %v603 = vadd.f32 0.0, %v602
        %v604 = vpop.f32.mrf.mxu0
        %605 = vdwg.mxu0
        %v606 = vadd.f32 %v528, %v603
        %607 = vst.msk [vmem:[#allocation5] sm:$0xff] %vm451, %v606
        %608 = vst.msk [vmem:[#allocation3] sm:$0xff] %vm519, %v502
        %v610 = vunpack.c.l.b16 %v450
        %v611 = vpack.c.b16 %v610, %v610
        %612 = vrot.lane.b32.xlu0 %v611, 112
        %v613 = vpop.permute.xlu0 %612
        %v615 = vsel %vm451, %v613, 0
        %617 = vmatprep.subr.bf16.mxu0 0
        %618 = vmatpush1.bf16.msra.mxu0 0
        %619 = vmatprep.subr.bf16.mxu0 0
        %620 = vmatpush1.bf16.msra.mxu0 0
        %621 = vmatprep.subr.bf16.mxu0 0
        %622 = vmatpush1.bf16.msra.mxu0 0
        %623 = vmatprep.subr.bf16.mxu0 0
        %624 = vmatpush1.bf16.msra.mxu0 0
        %625 = vmatprep.subr.bf16.mxu0 0
        %626 = vmatpush1.bf16.msra.mxu0 0
        %627 = vmatprep.subr.bf16.mxu0 0
        %628 = vmatpush1.bf16.msra.mxu0 0
        %629 = vmatprep.subr.bf16.mxu0 0
        %630 = vmatpush1.bf16.msra.mxu0 0
        %631 = vmatprep.subr.bf16.mxu0 0
        %632 = vmatpush1.bf16.msra.mxu0 %v446
        %633 = vmatprep.subr.bf16.mxu0 0
        %634 = vmatpush2.bf16.msra.mxu0 0
        %635 = vmatprep.subr.bf16.mxu0 0
        %636 = vmatpush2.bf16.msra.mxu0 0
        %637 = vmatprep.subr.bf16.mxu0 0
        %638 = vmatpush2.bf16.msra.mxu0 0
        %639 = vmatprep.subr.bf16.mxu0 0
        %640 = vmatpush2.bf16.msra.mxu0 0
        %641 = vmatprep.subr.bf16.mxu0 0
        %642 = vmatpush2.bf16.msra.mxu0 0
        %643 = vmatprep.subr.bf16.mxu0 0
        %644 = vmatpush2.bf16.msra.mxu0 0
        %645 = vmatprep.subr.bf16.mxu0 0
        %646 = vmatpush2.bf16.msra.mxu0 0
        %647 = vmatprep.subr.bf16.mxu0 0
        %648 = vmatpush2.bf16.msra.mxu0 0
        %649 = vmatprep.mubr.bf16.mxu0 0
        %650 = vmatmul.mubr.bf16.gmra.mxu0 %v615
        %v651 = vpop.f32.mrf.mxu0
        %v652 = vadd.f32 0.0, %v651
        %v653 = vpop.f32.mrf.mxu0
        %v654 = vpop.f32.mrf.mxu0
        %v655 = vpop.f32.mrf.mxu0
        %656 = vdwg.mxu0
        %v657 = vmul.f32 %v652, 0.25
        %s658 = scalar_lea.vmem [#allocation3], 8
        %v659 = vld [vmem:[%s658] sm:$0xff]
        %s660 = scalar_lea.vmem [#allocation4], 8
        %v661 = vld [vmem:[%s660] sm:$0xff]
        %v662 = vsel %vm498, %v657, -inf
        %663 = vmax.xlane.f32.xlu0 %v662
        %v664 = vpop.xlane.xlu0 %663
        %v665 = vmax.f32 %v659, %v664
        %v666 = vsub.f32 %v659, %v665
        %v667 = vmul.f32 %v666, 1.442695
        %v668 = vpow.pop %v667
        %670 = vset.pattern.permute.xlu0 0
        %671 = vperm.xlu0 %670, %v665
        %v672 = vpop.permute.xlu0 %671
        %v674 = vsub.f32 %v657, %v672
        %v675 = vmul.f32 %v674, 1.442695
        %v676 = vpow.pop %v675
        %v677 = vmul.f32 %v668, %v661
        %v678 = vsel %vm498, %v676, 0.0
        %679 = vadd.xlane.f32.xlu0 %v678
        %v680 = vpop.xlane.xlu0 %679
        %v681 = vadd.f32 %v677, %v680
        %682 = vst.msk [vmem:[%s660] sm:$0xff] %vm519, %v681
        %s683 = scalar_lea.vmem [#allocation5], 8
        %v684 = vld [vmem:[%s683] sm:$0xff]
        %686 = vset.pattern.permute.xlu0 0
        %687 = vperm.xlu0 %686, %v668
        %v688 = vpop.permute.xlu0 %687
        %v690 = vmul.f32 %v688, %v684
        %691 = vrot.lane.b32.xlu0 %v521, 48
        %v692 = vpop.permute.xlu0 %691
        %v695 = vsel %vm498, %v676, 0
        %697 = vmatprep.subr.mxu0 0.0
        %698 = vmatpush1.msra.mxu0 0.0
        %699 = vmatprep.subr.mxu0 0.0
        %700 = vmatpush1.msra.mxu0 0.0
        %701 = vmatprep.subr.mxu0 0.0
        %702 = vmatpush1.msra.mxu0 0.0
        %703 = vmatprep.subr.mxu0 0.0
        %704 = vmatpush1.msra.mxu0 0.0
        %705 = vmatprep.subr.mxu0 0.0
        %706 = vmatpush1.msra.mxu0 0.0
        %707 = vmatprep.subr.mxu0 0.0
        %708 = vmatpush1.msra.mxu0 0.0
        %709 = vmatprep.subr.mxu0 0.0
        %710 = vmatpush1.msra.mxu0 0.0
        %711 = vmatprep.subr.mxu0 0.0
        %712 = vmatpush1.msra.mxu0 0.0
        %713 = vmatprep.subr.mxu0 0.0
        %714 = vmatpush1.msra.mxu0 0.0
        %715 = vmatprep.subr.mxu0 0.0
        %716 = vmatpush1.msra.mxu0 0.0
        %717 = vmatprep.subr.mxu0 0.0
        %718 = vmatpush1.msra.mxu0 0.0
        %719 = vmatprep.subr.mxu0 0.0
        %720 = vmatpush1.msra.mxu0 0.0
        %721 = vmatprep.subr.mxu0 0.0
        %722 = vmatpush1.msra.mxu0 0.0
        %723 = vmatprep.subr.mxu0 0.0
        %724 = vmatpush1.msra.mxu0 0.0
        %725 = vmatprep.subr.mxu0 0.0
        %726 = vmatpush1.msra.mxu0 0.0
        %727 = vmatprep.subr.mxu0 0.0
        %728 = vmatpush1.msra.mxu0 %v692
        %729 = vmatprep.subr.mxu0 0.0
        %730 = vmatpush2.msra.mxu0 0.0
        %731 = vmatprep.subr.mxu0 0.0
        %732 = vmatpush2.msra.mxu0 0.0
        %733 = vmatprep.subr.mxu0 0.0
        %734 = vmatpush2.msra.mxu0 0.0
        %735 = vmatprep.subr.mxu0 0.0
        %736 = vmatpush2.msra.mxu0 0.0
        %737 = vmatprep.subr.mxu0 0.0
        %738 = vmatpush2.msra.mxu0 0.0
        %739 = vmatprep.subr.mxu0 0.0
        %740 = vmatpush2.msra.mxu0 0.0
        %741 = vmatprep.subr.mxu0 0.0
        %742 = vmatpush2.msra.mxu0 0.0
        %743 = vmatprep.subr.mxu0 0.0
        %744 = vmatpush2.msra.mxu0 0.0
        %745 = vmatprep.subr.mxu0 0.0
        %746 = vmatpush2.msra.mxu0 0.0
        %747 = vmatprep.subr.mxu0 0.0
        %748 = vmatpush2.msra.mxu0 0.0
        %749 = vmatprep.subr.mxu0 0.0
        %750 = vmatpush2.msra.mxu0 0.0
        %751 = vmatprep.subr.mxu0 0.0
        %752 = vmatpush2.msra.mxu0 0.0
        %753 = vmatprep.subr.mxu0 0.0
        %754 = vmatpush2.msra.mxu0 0.0
        %755 = vmatprep.subr.mxu0 0.0
        %756 = vmatpush2.msra.mxu0 0.0
        %757 = vmatprep.subr.mxu0 0.0
        %758 = vmatpush2.msra.mxu0 0.0
        %759 = vmatprep.subr.mxu0 0.0
        %760 = vmatpush2.msra.mxu0 0.0
        %761 = vmatprep.mubr.f32.mxu0 0.0
        %762 = vmatmul.mubr.f32.gmra.mxu0 %v695
        %v763 = vpop.f32.mrf.mxu0
        %v764 = vadd.f32 0.0, %v763
        %v765 = vpop.f32.mrf.mxu0
        %766 = vdwg.mxu0
        %v767 = vadd.f32 %v690, %v764
        %768 = vst.msk [vmem:[%s683] sm:$0xff] %vm451, %v767
        %769 = vst.msk [vmem:[%s658] sm:$0xff] %vm519, %v665
        %770 = vrot.lane.b32.xlu0 %v611, 96
        %v771 = vpop.permute.xlu0 %770
        %v773 = vsel %vm451, %v771, 0
        %775 = vmatprep.subr.bf16.mxu0 0
        %776 = vmatpush1.bf16.msra.mxu0 0
        %777 = vmatprep.subr.bf16.mxu0 0
        %778 = vmatpush1.bf16.msra.mxu0 0
        %779 = vmatprep.subr.bf16.mxu0 0
        %780 = vmatpush1.bf16.msra.mxu0 0
        %781 = vmatprep.subr.bf16.mxu0 0
        %782 = vmatpush1.bf16.msra.mxu0 0
        %783 = vmatprep.subr.bf16.mxu0 0
        %784 = vmatpush1.bf16.msra.mxu0 0
        %785 = vmatprep.subr.bf16.mxu0 0
        %786 = vmatpush1.bf16.msra.mxu0 0
        %787 = vmatprep.subr.bf16.mxu0 0
        %788 = vmatpush1.bf16.msra.mxu0 0
        %789 = vmatprep.subr.bf16.mxu0 0
        %790 = vmatpush1.bf16.msra.mxu0 %v447
        %791 = vmatprep.subr.bf16.mxu0 0
        %792 = vmatpush2.bf16.msra.mxu0 0
        %793 = vmatprep.subr.bf16.mxu0 0
        %794 = vmatpush2.bf16.msra.mxu0 0
        %795 = vmatprep.subr.bf16.mxu0 0
        %796 = vmatpush2.bf16.msra.mxu0 0
        %797 = vmatprep.subr.bf16.mxu0 0
        %798 = vmatpush2.bf16.msra.mxu0 0
        %799 = vmatprep.subr.bf16.mxu0 0
        %800 = vmatpush2.bf16.msra.mxu0 0
        %801 = vmatprep.subr.bf16.mxu0 0
        %802 = vmatpush2.bf16.msra.mxu0 0
        %803 = vmatprep.subr.bf16.mxu0 0
        %804 = vmatpush2.bf16.msra.mxu0 0
        %805 = vmatprep.subr.bf16.mxu0 0
        %806 = vmatpush2.bf16.msra.mxu0 0
        %807 = vmatprep.mubr.bf16.mxu0 0
        %808 = vmatmul.mubr.bf16.gmra.mxu0 %v773
        %v809 = vpop.f32.mrf.mxu0
        %v810 = vadd.f32 0.0, %v809
        %v811 = vpop.f32.mrf.mxu0
        %v812 = vpop.f32.mrf.mxu0
        %v813 = vpop.f32.mrf.mxu0
        %814 = vdwg.mxu0
        %v815 = vmul.f32 %v810, 0.25
        %s816 = scalar_lea.vmem [#allocation3], 16
        %v817 = vld [vmem:[%s816] sm:$0xff]
        %s818 = scalar_lea.vmem [#allocation4], 16
        %v819 = vld [vmem:[%s818] sm:$0xff]
        %v820 = vsel %vm498, %v815, -inf
        %821 = vmax.xlane.f32.xlu0 %v820
        %v822 = vpop.xlane.xlu0 %821
        %v823 = vmax.f32 %v817, %v822
        %v824 = vsub.f32 %v817, %v823
        %v825 = vmul.f32 %v824, 1.442695
        %v826 = vpow.pop %v825
        %828 = vset.pattern.permute.xlu0 0
        %829 = vperm.xlu0 %828, %v823
        %v830 = vpop.permute.xlu0 %829
        %v832 = vsub.f32 %v815, %v830
        %v833 = vmul.f32 %v832, 1.442695
        %v834 = vpow.pop %v833
        %v835 = vmul.f32 %v826, %v819
        %v836 = vsel %vm498, %v834, 0.0
        %837 = vadd.xlane.f32.xlu0 %v836
        %v838 = vpop.xlane.xlu0 %837
        %v839 = vadd.f32 %v835, %v838
        %840 = vst.msk [vmem:[%s818] sm:$0xff] %vm519, %v839
        %s841 = scalar_lea.vmem [#allocation5], 16
        %v842 = vld [vmem:[%s841] sm:$0xff]
        %844 = vset.pattern.permute.xlu0 0
        %845 = vperm.xlu0 %844, %v826
        %v846 = vpop.permute.xlu0 %845
        %v848 = vmul.f32 %v846, %v842
        %849 = vrot.lane.b32.xlu0 %v521, 32
        %v850 = vpop.permute.xlu0 %849
        %v853 = vsel %vm498, %v834, 0
        %855 = vmatprep.subr.mxu0 0.0
        %856 = vmatpush1.msra.mxu0 0.0
        %857 = vmatprep.subr.mxu0 0.0
        %858 = vmatpush1.msra.mxu0 0.0
        %859 = vmatprep.subr.mxu0 0.0
        %860 = vmatpush1.msra.mxu0 0.0
        %861 = vmatprep.subr.mxu0 0.0
        %862 = vmatpush1.msra.mxu0 0.0
        %863 = vmatprep.subr.mxu0 0.0
        %864 = vmatpush1.msra.mxu0 0.0
        %865 = vmatprep.subr.mxu0 0.0
        %866 = vmatpush1.msra.mxu0 0.0
        %867 = vmatprep.subr.mxu0 0.0
        %868 = vmatpush1.msra.mxu0 0.0
        %869 = vmatprep.subr.mxu0 0.0
        %870 = vmatpush1.msra.mxu0 0.0
        %871 = vmatprep.subr.mxu0 0.0
        %872 = vmatpush1.msra.mxu0 0.0
        %873 = vmatprep.subr.mxu0 0.0
        %874 = vmatpush1.msra.mxu0 0.0
        %875 = vmatprep.subr.mxu0 0.0
        %876 = vmatpush1.msra.mxu0 0.0
        %877 = vmatprep.subr.mxu0 0.0
        %878 = vmatpush1.msra.mxu0 0.0
        %879 = vmatprep.subr.mxu0 0.0
        %880 = vmatpush1.msra.mxu0 0.0
        %881 = vmatprep.subr.mxu0 0.0
        %882 = vmatpush1.msra.mxu0 0.0
        %883 = vmatprep.subr.mxu0 0.0
        %884 = vmatpush1.msra.mxu0 0.0
        %885 = vmatprep.subr.mxu0 0.0
        %886 = vmatpush1.msra.mxu0 %v850
        %887 = vmatprep.subr.mxu0 0.0
        %888 = vmatpush2.msra.mxu0 0.0
        %889 = vmatprep.subr.mxu0 0.0
        %890 = vmatpush2.msra.mxu0 0.0
        %891 = vmatprep.subr.mxu0 0.0
        %892 = vmatpush2.msra.mxu0 0.0
        %893 = vmatprep.subr.mxu0 0.0
        %894 = vmatpush2.msra.mxu0 0.0
        %895 = vmatprep.subr.mxu0 0.0
        %896 = vmatpush2.msra.mxu0 0.0
        %897 = vmatprep.subr.mxu0 0.0
        %898 = vmatpush2.msra.mxu0 0.0
        %899 = vmatprep.subr.mxu0 0.0
        %900 = vmatpush2.msra.mxu0 0.0
        %901 = vmatprep.subr.mxu0 0.0
        %902 = vmatpush2.msra.mxu0 0.0
        %903 = vmatprep.subr.mxu0 0.0
        %904 = vmatpush2.msra.mxu0 0.0
        %905 = vmatprep.subr.mxu0 0.0
        %906 = vmatpush2.msra.mxu0 0.0
        %907 = vmatprep.subr.mxu0 0.0
        %908 = vmatpush2.msra.mxu0 0.0
        %909 = vmatprep.subr.mxu0 0.0
        %910 = vmatpush2.msra.mxu0 0.0
        %911 = vmatprep.subr.mxu0 0.0
        %912 = vmatpush2.msra.mxu0 0.0
        %913 = vmatprep.subr.mxu0 0.0
        %914 = vmatpush2.msra.mxu0 0.0
        %915 = vmatprep.subr.mxu0 0.0
        %916 = vmatpush2.msra.mxu0 0.0
        %917 = vmatprep.subr.mxu0 0.0
        %918 = vmatpush2.msra.mxu0 0.0
        %919 = vmatprep.mubr.f32.mxu0 0.0
        %920 = vmatmul.mubr.f32.gmra.mxu0 %v853
        %v921 = vpop.f32.mrf.mxu0
        %v922 = vadd.f32 0.0, %v921
        %v923 = vpop.f32.mrf.mxu0
        %924 = vdwg.mxu0
        %v925 = vadd.f32 %v848, %v922
        %926 = vst.msk [vmem:[%s841] sm:$0xff] %vm451, %v925
        %927 = vst.msk [vmem:[%s816] sm:$0xff] %vm519, %v823
        %928 = vrot.lane.b32.xlu0 %v611, 80
        %v929 = vpop.permute.xlu0 %928
        %v931 = vsel %vm451, %v929, 0
        %933 = vmatprep.subr.bf16.mxu0 0
        %934 = vmatpush1.bf16.msra.mxu0 0
        %935 = vmatprep.subr.bf16.mxu0 0
        %936 = vmatpush1.bf16.msra.mxu0 0
        %937 = vmatprep.subr.bf16.mxu0 0
        %938 = vmatpush1.bf16.msra.mxu0 0
        %939 = vmatprep.subr.bf16.mxu0 0
        %940 = vmatpush1.bf16.msra.mxu0 0
        %941 = vmatprep.subr.bf16.mxu0 0
        %942 = vmatpush1.bf16.msra.mxu0 0
        %943 = vmatprep.subr.bf16.mxu0 0
        %944 = vmatpush1.bf16.msra.mxu0 0
        %945 = vmatprep.subr.bf16.mxu0 0
        %946 = vmatpush1.bf16.msra.mxu0 0
        %947 = vmatprep.subr.bf16.mxu0 0
        %948 = vmatpush1.bf16.msra.mxu0 %v448
        %949 = vmatprep.subr.bf16.mxu0 0
        %950 = vmatpush2.bf16.msra.mxu0 0
        %951 = vmatprep.subr.bf16.mxu0 0
        %952 = vmatpush2.bf16.msra.mxu0 0
        %953 = vmatprep.subr.bf16.mxu0 0
        %954 = vmatpush2.bf16.msra.mxu0 0
        %955 = vmatprep.subr.bf16.mxu0 0
        %956 = vmatpush2.bf16.msra.mxu0 0
        %957 = vmatprep.subr.bf16.mxu0 0
        %958 = vmatpush2.bf16.msra.mxu0 0
        %959 = vmatprep.subr.bf16.mxu0 0
        %960 = vmatpush2.bf16.msra.mxu0 0
        %961 = vmatprep.subr.bf16.mxu0 0
        %962 = vmatpush2.bf16.msra.mxu0 0
        %963 = vmatprep.subr.bf16.mxu0 0
        %964 = vmatpush2.bf16.msra.mxu0 0
        %965 = vmatprep.mubr.bf16.mxu0 0
        %966 = vmatmul.mubr.bf16.gmra.mxu0 %v931
        %v967 = vpop.f32.mrf.mxu0
        %v968 = vadd.f32 0.0, %v967
        %v969 = vpop.f32.mrf.mxu0
        %v970 = vpop.f32.mrf.mxu0
        %v971 = vpop.f32.mrf.mxu0
        %972 = vdwg.mxu0
        %v973 = vmul.f32 %v968, 0.25
        %s974 = scalar_lea.vmem [#allocation3], 24
        %v975 = vld [vmem:[%s974] sm:$0xff]
        %s976 = scalar_lea.vmem [#allocation4], 24
        %v977 = vld [vmem:[%s976] sm:$0xff]
        %v978 = vsel %vm498, %v973, -inf
        %979 = vmax.xlane.f32.xlu0 %v978
        %v980 = vpop.xlane.xlu0 %979
        %v981 = vmax.f32 %v975, %v980
        %v982 = vsub.f32 %v975, %v981
        %v983 = vmul.f32 %v982, 1.442695
        %v984 = vpow.pop %v983
        %986 = vset.pattern.permute.xlu0 0
        %987 = vperm.xlu0 %986, %v981
        %v988 = vpop.permute.xlu0 %987
        %v990 = vsub.f32 %v973, %v988
        %v991 = vmul.f32 %v990, 1.442695
        %v992 = vpow.pop %v991
        %v993 = vmul.f32 %v984, %v977
        %v994 = vsel %vm498, %v992, 0.0
        %995 = vadd.xlane.f32.xlu0 %v994
        %v996 = vpop.xlane.xlu0 %995
        %v997 = vadd.f32 %v993, %v996
        %998 = vst.msk [vmem:[%s976] sm:$0xff] %vm519, %v997
        %s999 = scalar_lea.vmem [#allocation5], 24
        %v1000 = vld [vmem:[%s999] sm:$0xff]
        %1002 = vset.pattern.permute.xlu0 0
        %1003 = vperm.xlu0 %1002, %v984
        %v1004 = vpop.permute.xlu0 %1003
        %v1006 = vmul.f32 %v1004, %v1000
        %1007 = vrot.lane.b32.xlu0 %v521, 16
        %v1008 = vpop.permute.xlu0 %1007
        %v1011 = vsel %vm498, %v992, 0
        %1013 = vmatprep.subr.mxu0 0.0
        %1014 = vmatpush1.msra.mxu0 0.0
        %1015 = vmatprep.subr.mxu0 0.0
        %1016 = vmatpush1.msra.mxu0 0.0
        %1017 = vmatprep.subr.mxu0 0.0
        %1018 = vmatpush1.msra.mxu0 0.0
        %1019 = vmatprep.subr.mxu0 0.0
        %1020 = vmatpush1.msra.mxu0 0.0
        %1021 = vmatprep.subr.mxu0 0.0
        %1022 = vmatpush1.msra.mxu0 0.0
        %1023 = vmatprep.subr.mxu0 0.0
        %1024 = vmatpush1.msra.mxu0 0.0
        %1025 = vmatprep.subr.mxu0 0.0
        %1026 = vmatpush1.msra.mxu0 0.0
        %1027 = vmatprep.subr.mxu0 0.0
        %1028 = vmatpush1.msra.mxu0 0.0
        %1029 = vmatprep.subr.mxu0 0.0
        %1030 = vmatpush1.msra.mxu0 0.0
        %1031 = vmatprep.subr.mxu0 0.0
        %1032 = vmatpush1.msra.mxu0 0.0
        %1033 = vmatprep.subr.mxu0 0.0
        %1034 = vmatpush1.msra.mxu0 0.0
        %1035 = vmatprep.subr.mxu0 0.0
        %1036 = vmatpush1.msra.mxu0 0.0
        %1037 = vmatprep.subr.mxu0 0.0
        %1038 = vmatpush1.msra.mxu0 0.0
        %1039 = vmatprep.subr.mxu0 0.0
        %1040 = vmatpush1.msra.mxu0 0.0
        %1041 = vmatprep.subr.mxu0 0.0
        %1042 = vmatpush1.msra.mxu0 0.0
        %1043 = vmatprep.subr.mxu0 0.0
        %1044 = vmatpush1.msra.mxu0 %v1008
        %1045 = vmatprep.subr.mxu0 0.0
        %1046 = vmatpush2.msra.mxu0 0.0
        %1047 = vmatprep.subr.mxu0 0.0
        %1048 = vmatpush2.msra.mxu0 0.0
        %1049 = vmatprep.subr.mxu0 0.0
        %1050 = vmatpush2.msra.mxu0 0.0
        %1051 = vmatprep.subr.mxu0 0.0
        %1052 = vmatpush2.msra.mxu0 0.0
        %1053 = vmatprep.subr.mxu0 0.0
        %1054 = vmatpush2.msra.mxu0 0.0
        %1055 = vmatprep.subr.mxu0 0.0
        %1056 = vmatpush2.msra.mxu0 0.0
        %1057 = vmatprep.subr.mxu0 0.0
        %1058 = vmatpush2.msra.mxu0 0.0
        %1059 = vmatprep.subr.mxu0 0.0
        %1060 = vmatpush2.msra.mxu0 0.0
        %1061 = vmatprep.subr.mxu0 0.0
        %1062 = vmatpush2.msra.mxu0 0.0
        %1063 = vmatprep.subr.mxu0 0.0
        %1064 = vmatpush2.msra.mxu0 0.0
        %1065 = vmatprep.subr.mxu0 0.0
        %1066 = vmatpush2.msra.mxu0 0.0
        %1067 = vmatprep.subr.mxu0 0.0
        %1068 = vmatpush2.msra.mxu0 0.0
        %1069 = vmatprep.subr.mxu0 0.0
        %1070 = vmatpush2.msra.mxu0 0.0
        %1071 = vmatprep.subr.mxu0 0.0
        %1072 = vmatpush2.msra.mxu0 0.0
        %1073 = vmatprep.subr.mxu0 0.0
        %1074 = vmatpush2.msra.mxu0 0.0
        %1075 = vmatprep.subr.mxu0 0.0
        %1076 = vmatpush2.msra.mxu0 0.0
        %1077 = vmatprep.mubr.f32.mxu0 0.0
        %1078 = vmatmul.mubr.f32.gmra.mxu0 %v1011
        %v1079 = vpop.f32.mrf.mxu0
        %v1080 = vadd.f32 0.0, %v1079
        %v1081 = vpop.f32.mrf.mxu0
        %1082 = vdwg.mxu0
        %v1083 = vadd.f32 %v1006, %v1080
        %1084 = vst.msk [vmem:[%s999] sm:$0xff] %vm451, %v1083
        %1085 = vst.msk [vmem:[%s974] sm:$0xff] %vm519, %v981
        %p1086 = scmp.eq.s32.totalorder %s27, 2
        // Predicated region
        $region49: #{tpu_custom_call.1} parent=39 // pred_check
          %p1087 = pneg %p1086
        $region50: #{tpu_custom_call.1} parent=39 // pred_check_branch
          %1089 = sbr.rel (%p1087) target = $region52
        $region51: #{tpu_custom_call.1} parent=39 // pred_region
          %v1090 = vld [vmem:[%s4] sm:$0xf]
          %v1091 = vld [vmem:[%s4 + $0x4] sm:$0xf]
          %v1092 = vld [vmem:[%s4 + $0x8] sm:$0xf]
          %v1093 = vld [vmem:[%s4 + $0xc] sm:$0xf]
          %v1094 = vld [vmem:[%s4 + $0x10] sm:$0xf]
          %v1095 = vld [vmem:[%s4 + $0x14] sm:$0xf]
          %v1096 = vld [vmem:[%s4 + $0x18] sm:$0xf]
          %v1097 = vld [vmem:[%s4 + $0x1c] sm:$0xf]
          %v1098 = vld [vmem:[#allocation5] sm:$0xff]
          %v1099 = vld [vmem:[#allocation4] sm:$0xff]
          %1101 = vset.pattern.permute.xlu0 0
          %1102 = vperm.xlu0 %1101, %v1099
          %v1103 = vpop.permute.xlu0 %1102
          %v1105 = vrcp.pop %v1103
          %v1106 = vmul.f32 %v1098, %v1105
          %v1107 = vpack.c.bf16 %v1106, %v1106
          %v1108 = vld [vmem:[%s683] sm:$0xff]
          %v1109 = vld [vmem:[%s660] sm:$0xff]
          %1111 = vset.pattern.permute.xlu0 0
          %1112 = vperm.xlu0 %1111, %v1109
          %v1113 = vpop.permute.xlu0 %1112
          %v1115 = vrcp.pop %v1113
          %v1116 = vmul.f32 %v1108, %v1115
          %v1117 = vpack.c.bf16 %v1116, %v1116
          %v1120 = vunpack.c.l.b16 %v1092
          %v1121 = vunpack.c.l.b16 %v1093
          %v1122 = vpack.c.b16 %v1121, %v1120
          %v1125 = vsel %vm451, %v1117, 0
          %1127 = vmatprep.subr.bf16.mxu0 0
          %1128 = vmatpush1.bf16.msra.mxu0 0
          %1129 = vmatprep.subr.bf16.mxu0 0
          %1130 = vmatpush1.bf16.msra.mxu0 0
          %1131 = vmatprep.subr.bf16.mxu0 0
          %1132 = vmatpush1.bf16.msra.mxu0 0
          %1133 = vmatprep.subr.bf16.mxu0 0
          %1134 = vmatpush1.bf16.msra.mxu0 0
          %1135 = vmatprep.subr.bf16.mxu0 0
          %1136 = vmatpush1.bf16.msra.mxu0 0
          %1137 = vmatprep.subr.bf16.mxu0 0
          %1138 = vmatpush1.bf16.msra.mxu0 0
          %1139 = vmatprep.subr.bf16.mxu0 0
          %1140 = vmatpush1.bf16.msra.mxu0 0
          %1141 = vmatprep.subr.bf16.mxu0 0
          %1142 = vmatpush1.bf16.msra.mxu0 %v1122
          %1143 = vmatprep.subr.bf16.mxu0 0
          %1144 = vmatpush2.bf16.msra.mxu0 0
          %1145 = vmatprep.subr.bf16.mxu0 0
          %1146 = vmatpush2.bf16.msra.mxu0 0
          %1147 = vmatprep.subr.bf16.mxu0 0
          %1148 = vmatpush2.bf16.msra.mxu0 0
          %1149 = vmatprep.subr.bf16.mxu0 0
          %1150 = vmatpush2.bf16.msra.mxu0 0
          %1151 = vmatprep.subr.bf16.mxu0 0
          %1152 = vmatpush2.bf16.msra.mxu0 0
          %1153 = vmatprep.subr.bf16.mxu0 0
          %1154 = vmatpush2.bf16.msra.mxu0 0
          %1155 = vmatprep.subr.bf16.mxu0 0
          %1156 = vmatpush2.bf16.msra.mxu0 0
          %1157 = vmatprep.subr.bf16.mxu0 0
          %1158 = vmatpush2.bf16.msra.mxu0 0
          %1159 = vmatprep.mubr.bf16.mxu0 0
          %1160 = vmatmul.mubr.bf16.gmra.mxu0 %v1125
          %v1161 = vpop.f32.mrf.mxu0
          %v1162 = vadd.f32 0.0, %v1161
          %v1163 = vpop.f32.mrf.mxu0
          %v1164 = vpop.f32.mrf.mxu0
          %v1165 = vpop.f32.mrf.mxu0
          %1166 = vdwg.mxu0
          %v1169 = vunpack.c.l.b16 %v1090
          %v1170 = vunpack.c.l.b16 %v1091
          %v1171 = vpack.c.b16 %v1170, %v1169
          %v1174 = vsel %vm451, %v1107, 0
          %1176 = vmatprep.subr.bf16.mxu0 0
          %1177 = vmatpush1.bf16.msra.mxu0 0
          %1178 = vmatprep.subr.bf16.mxu0 0
          %1179 = vmatpush1.bf16.msra.mxu0 0
          %1180 = vmatprep.subr.bf16.mxu0 0
          %1181 = vmatpush1.bf16.msra.mxu0 0
          %1182 = vmatprep.subr.bf16.mxu0 0
          %1183 = vmatpush1.bf16.msra.mxu0 0
          %1184 = vmatprep.subr.bf16.mxu0 0
          %1185 = vmatpush1.bf16.msra.mxu0 0
          %1186 = vmatprep.subr.bf16.mxu0 0
          %1187 = vmatpush1.bf16.msra.mxu0 0
          %1188 = vmatprep.subr.bf16.mxu0 0
          %1189 = vmatpush1.bf16.msra.mxu0 0
          %1190 = vmatprep.subr.bf16.mxu0 0
          %1191 = vmatpush1.bf16.msra.mxu0 %v1171
          %1192 = vmatprep.subr.bf16.mxu0 0
          %1193 = vmatpush2.bf16.msra.mxu0 0
          %1194 = vmatprep.subr.bf16.mxu0 0
          %1195 = vmatpush2.bf16.msra.mxu0 0
          %1196 = vmatprep.subr.bf16.mxu0 0
          %1197 = vmatpush2.bf16.msra.mxu0 0
          %1198 = vmatprep.subr.bf16.mxu0 0
          %1199 = vmatpush2.bf16.msra.mxu0 0
          %1200 = vmatprep.subr.bf16.mxu0 0
          %1201 = vmatpush2.bf16.msra.mxu0 0
          %1202 = vmatprep.subr.bf16.mxu0 0
          %1203 = vmatpush2.bf16.msra.mxu0 0
          %1204 = vmatprep.subr.bf16.mxu0 0
          %1205 = vmatpush2.bf16.msra.mxu0 0
          %1206 = vmatprep.subr.bf16.mxu0 0
          %1207 = vmatpush2.bf16.msra.mxu0 0
          %1208 = vmatprep.mubr.bf16.mxu0 0
          %1209 = vmatmul.mubr.bf16.gmra.mxu0 %v1174
          %v1210 = vpop.f32.mrf.mxu0
          %v1211 = vadd.f32 %v1162, %v1210
          %v1212 = vpop.f32.mrf.mxu0
          %v1213 = vpop.f32.mrf.mxu0
          %v1214 = vpop.f32.mrf.mxu0
          %1215 = vdwg.mxu0
          %v1216 = vld [vmem:[%s841] sm:$0xff]
          %v1217 = vld [vmem:[%s818] sm:$0xff]
          %1219 = vset.pattern.permute.xlu0 0
          %1220 = vperm.xlu0 %1219, %v1217
          %v1221 = vpop.permute.xlu0 %1220
          %v1223 = vrcp.pop %v1221
          %v1224 = vmul.f32 %v1216, %v1223
          %v1225 = vpack.c.bf16 %v1224, %v1224
          %v1228 = vunpack.c.l.b16 %v1094
          %v1229 = vunpack.c.l.b16 %v1095
          %v1230 = vpack.c.b16 %v1229, %v1228
          %v1233 = vsel %vm451, %v1225, 0
          %1235 = vmatprep.subr.bf16.mxu0 0
          %1236 = vmatpush1.bf16.msra.mxu0 0
          %1237 = vmatprep.subr.bf16.mxu0 0
          %1238 = vmatpush1.bf16.msra.mxu0 0
          %1239 = vmatprep.subr.bf16.mxu0 0
          %1240 = vmatpush1.bf16.msra.mxu0 0
          %1241 = vmatprep.subr.bf16.mxu0 0
          %1242 = vmatpush1.bf16.msra.mxu0 0
          %1243 = vmatprep.subr.bf16.mxu0 0
          %1244 = vmatpush1.bf16.msra.mxu0 0
          %1245 = vmatprep.subr.bf16.mxu0 0
          %1246 = vmatpush1.bf16.msra.mxu0 0
          %1247 = vmatprep.subr.bf16.mxu0 0
          %1248 = vmatpush1.bf16.msra.mxu0 0
          %1249 = vmatprep.subr.bf16.mxu0 0
          %1250 = vmatpush1.bf16.msra.mxu0 %v1230
          %1251 = vmatprep.subr.bf16.mxu0 0
          %1252 = vmatpush2.bf16.msra.mxu0 0
          %1253 = vmatprep.subr.bf16.mxu0 0
          %1254 = vmatpush2.bf16.msra.mxu0 0
          %1255 = vmatprep.subr.bf16.mxu0 0
          %1256 = vmatpush2.bf16.msra.mxu0 0
          %1257 = vmatprep.subr.bf16.mxu0 0
          %1258 = vmatpush2.bf16.msra.mxu0 0
          %1259 = vmatprep.subr.bf16.mxu0 0
          %1260 = vmatpush2.bf16.msra.mxu0 0
          %1261 = vmatprep.subr.bf16.mxu0 0
          %1262 = vmatpush2.bf16.msra.mxu0 0
          %1263 = vmatprep.subr.bf16.mxu0 0
          %1264 = vmatpush2.bf16.msra.mxu0 0
          %1265 = vmatprep.subr.bf16.mxu0 0
          %1266 = vmatpush2.bf16.msra.mxu0 0
          %1267 = vmatprep.mubr.bf16.mxu0 0
          %1268 = vmatmul.mubr.bf16.gmra.mxu0 %v1233
          %v1269 = vpop.f32.mrf.mxu0
          %v1270 = vadd.f32 0.0, %v1269
          %v1271 = vpop.f32.mrf.mxu0
          %v1272 = vpop.f32.mrf.mxu0
          %v1273 = vpop.f32.mrf.mxu0
          %1274 = vdwg.mxu0
          %v1275 = vadd.f32 %v1211, %v1270
          %v1276 = vld [vmem:[%s999] sm:$0xff]
          %v1277 = vld [vmem:[%s976] sm:$0xff]
          %1279 = vset.pattern.permute.xlu0 0
          %1280 = vperm.xlu0 %1279, %v1277
          %v1281 = vpop.permute.xlu0 %1280
          %v1283 = vrcp.pop %v1281
          %v1284 = vmul.f32 %v1276, %v1283
          %v1285 = vpack.c.bf16 %v1284, %v1284
          %v1288 = vunpack.c.l.b16 %v1096
          %v1289 = vunpack.c.l.b16 %v1097
          %v1290 = vpack.c.b16 %v1289, %v1288
          %v1293 = vsel %vm451, %v1285, 0
          %1295 = vmatprep.subr.bf16.mxu0 0
          %1296 = vmatpush1.bf16.msra.mxu0 0
          %1297 = vmatprep.subr.bf16.mxu0 0
          %1298 = vmatpush1.bf16.msra.mxu0 0
          %1299 = vmatprep.subr.bf16.mxu0 0
          %1300 = vmatpush1.bf16.msra.mxu0 0
          %1301 = vmatprep.subr.bf16.mxu0 0
          %1302 = vmatpush1.bf16.msra.mxu0 0
          %1303 = vmatprep.subr.bf16.mxu0 0
          %1304 = vmatpush1.bf16.msra.mxu0 0
          %1305 = vmatprep.subr.bf16.mxu0 0
          %1306 = vmatpush1.bf16.msra.mxu0 0
          %1307 = vmatprep.subr.bf16.mxu0 0
          %1308 = vmatpush1.bf16.msra.mxu0 0
          %1309 = vmatprep.subr.bf16.mxu0 0
          %1310 = vmatpush1.bf16.msra.mxu0 %v1290
          %1311 = vmatprep.subr.bf16.mxu0 0
          %1312 = vmatpush2.bf16.msra.mxu0 0
          %1313 = vmatprep.subr.bf16.mxu0 0
          %1314 = vmatpush2.bf16.msra.mxu0 0
          %1315 = vmatprep.subr.bf16.mxu0 0
          %1316 = vmatpush2.bf16.msra.mxu0 0
          %1317 = vmatprep.subr.bf16.mxu0 0
          %1318 = vmatpush2.bf16.msra.mxu0 0
          %1319 = vmatprep.subr.bf16.mxu0 0
          %1320 = vmatpush2.bf16.msra.mxu0 0
          %1321 = vmatprep.subr.bf16.mxu0 0
          %1322 = vmatpush2.bf16.msra.mxu0 0
          %1323 = vmatprep.subr.bf16.mxu0 0
          %1324 = vmatpush2.bf16.msra.mxu0 0
          %1325 = vmatprep.subr.bf16.mxu0 0
          %1326 = vmatpush2.bf16.msra.mxu0 0
          %1327 = vmatprep.mubr.bf16.mxu0 0
          %1328 = vmatmul.mubr.bf16.gmra.mxu0 %v1293
          %v1329 = vpop.f32.mrf.mxu0
          %v1330 = vadd.f32 0.0, %v1329
          %v1331 = vpop.f32.mrf.mxu0
          %v1332 = vpop.f32.mrf.mxu0
          %v1333 = vpop.f32.mrf.mxu0
          %1334 = vdwg.mxu0
          %v1335 = vadd.f32 %v1275, %v1330
          %1336 = vst.msk [vmem:[%s264] sm:$0xff] %vm369, %v1335
        $region52: #{tpu_custom_call.1} parent=39 // pred_fallthru
          _
        %s1337 = sand.u32 %s157, 1
        %s1338 = scalar_lea.sflag [#allocation8], %s1337
        %s1339 = sand.u32 %s157, 1
        %s1340 = smul.addr %s1339, 8
        %s1341 = scalar_lea.vmem [#allocation9], %s1340
        // Predicated region
        $region53: #{tpu_custom_call.1} parent=39 // pred_check
          %p1342 = pneg %p167
        $region54: #{tpu_custom_call.1} parent=39 // pred_check_branch
          %1344 = sbr.rel (%p1342) target = $region56
        $region55: #{tpu_custom_call.1} parent=39 // pred_region
          %s1346 = ssub.s32 128, 128
          %1347 = vsyncadd %s1338, %s1346
          %s1348 = smul.addr %s26, 128
          %s1349 = scalar_lea.hbm %s5, %s1348
          %s1351 = sshll.u32 %s1341, 4
          %s1352 = int_to_ptr.vmem [resolvable:$true] %s1351
          %1354 = dma.vmem_to_hbm [thread:$0]  %s1352, 128, %s1349, %s1338
        $region56: #{tpu_custom_call.1} parent=39 // pred_fallthru
          _
      $region40: #{tpu_custom_call.1} parent=5 // pred_fallthru
        _
      %p1355 = scmp.le.s32.totalorder 2, %s17
      // Predicated region
      $region57: #{tpu_custom_call.1} parent=5 // pred_check
        %p1356 = pneg %p1355
      $region58: #{tpu_custom_call.1} parent=5 // pred_check_branch
        %1358 = sbr.rel (%p1356) target = $region60
      $region59: #{tpu_custom_call.1} parent=5 // pred_region
        %s1359 = ssub.s32 %s17, 2
        // Predicated region
        $region61: #{tpu_custom_call.1} parent=59 // pred_check
          %p1360 = pneg %p173
        $region62: #{tpu_custom_call.1} parent=59 // pred_check_branch
          %1362 = sbr.rel (%p1360) target = $region64
        $region63: #{tpu_custom_call.1} parent=59 // pred_region
          %s1363 = sand.u32 %s158, 1
          %s1364 = scalar_lea.sflag [#allocation8], %s1363
          %s1365 = sand.u32 %s158, 1
          %s1366 = smul.addr %s1365, 8
          %s1367 = scalar_lea.vmem [#allocation9], %s1366
          %1368 = dma.done %s1364, 128
        $region64: #{tpu_custom_call.1} parent=59 // pred_fallthru
          _
      $region60: #{tpu_custom_call.1} parent=5 // pred_fallthru
        _
    $region6: #{tpu_custom_call.1} parent=1 // loop_footer
      %s21 = sadd.s32 1, %s17
    $region7: #{tpu_custom_call.1} parent=1 // loop_footer_branch
      %16 = sbr.rel target = $region3
    $region8: #{tpu_custom_call.1} parent=1 // loop_exit
      _
    %1369 = vsyncpa [#allocation7], 1
    %s1370 = scalar_lea.sflag [#allocation7], 1
    %1371 = vsyncpa %s1370, 1
    %1372 = vsyncpa [#allocation8], 1
    %s1373 = scalar_lea.sflag [#allocation8], 1
    %1374 = vsyncpa %s1373, 1

</llo_original>
